<compile_context>
chip_gen: v7x
topology: tpu7x:2x2x1
jax: 0.10.0
libtpu: 0.0.40
codegen_flags: <defaults>
</compile_context>

<pallas_src>
import functools

import jax
import jax.numpy as jnp
import numpy as np
from jax.experimental import pallas as pl
from jax.experimental.pallas import tpu as pltpu


def _round_up(a, b):
    return -(-a // b) * b


# ----------------------------------------------------------------------------
# Pallas kernel: PointConv message MLP + max aggregation over neighbor slabs
# ----------------------------------------------------------------------------
def pointconv_kernel(feat_ref, w1_ref, b1_ref, w2_ref, b2_ref, w3_ref, b3_ref,
                     out_ref, h2_ref):
    # feat_ref: [Cin_pad, K*TM] bf16  (channels on sublanes, points on lanes,
    #                                  k-major within the tile)
    # wX_ref  : [H_out, H_in]   bf16  transposed weights
    # bX_ref  : [H_out, 1]      f32   bias columns (lane-broadcast)
    # out_ref : [Cout, TM]      f32   lane-dense output block
    # h2_ref  : [H2, K*TM]      bf16  VMEM scratch (layer-2 activations)
    cout, tm = out_ref.shape
    k = h2_ref.shape[1] // tm

    # Layers 1 & 2 over the whole K*TM lane extent (lane-dense VPU work).
    f = feat_ref[...]
    h = jnp.dot(w1_ref[...], f, preferred_element_type=jnp.float32)
    h = jnp.maximum(h + b1_ref[...], 0.0).astype(jnp.bfloat16)      # [H1, K*TM]
    h = jnp.dot(w2_ref[...], h, preferred_element_type=jnp.float32)
    h2_ref[...] = jnp.maximum(h + b2_ref[...], 0.0).astype(jnp.bfloat16)

    # Layer 3 fused with the max over the K neighbor slabs: one [Cout, TM]
    # accumulator, one small matmul per slab, no [K*TM, Cout] intermediate.
    w3 = w3_ref[...]
    b3 = b3_ref[...]

    def body(kk, acc):
        start = pl.multiple_of(kk * tm, 128)
        slab = h2_ref[:, pl.ds(start, tm)]                           # [H2, TM]
        y = jnp.dot(w3, slab, preferred_element_type=jnp.float32) + b3
        return jnp.maximum(acc, jnp.maximum(y, 0.0))

    acc0 = jnp.full((cout, tm), -jnp.inf, jnp.float32)
    out_ref[...] = jax.lax.fori_loop(0, k, body, acc0)


def pointconv_pallas(feat2d, params, *, k, tile_m):
    """feat2d: [Cin_pad, (M_pad//tile_m)*k*tile_m] bf16 -> [Cout, M_pad] f32."""
    w1, b1, w2, b2, w3, b3 = params
    cin_pad, total = feat2d.shape
    num_tiles = total // (k * tile_m)
    m_pad = num_tiles * tile_m
    cin, h1 = w1.shape
    h2 = w2.shape[1]
    cout = w3.shape[1]

    # Transposed bf16 weights (out-features on sublanes); Cin zero-padded so the
    # padded feature channel contributes nothing.  Biases stay f32 columns.
    w1t = jnp.pad(w1, ((0, cin_pad - cin), (0, 0))).T.astype(jnp.bfloat16)
    w2t = w2.T.astype(jnp.bfloat16)
    w3t = w3.T.astype(jnp.bfloat16)
    b1c = b1.reshape(h1, 1).astype(jnp.float32)
    b2c = b2.reshape(h2, 1).astype(jnp.float32)
    b3c = b3.reshape(cout, 1).astype(jnp.float32)

    flops = 2 * m_pad * k * (cin_pad * h1 + h1 * h2 + h2 * cout)
    bytes_accessed = (feat2d.size * 2 + m_pad * cout * 4
                      + (w1t.size + w2t.size + w3t.size) * 2
                      + (b1c.size + b2c.size + b3c.size) * 4)
    cost = pl.CostEstimate(flops=flops, transcendentals=0,
                           bytes_accessed=bytes_accessed)

    full = lambda i: (0, 0)
    return pl.pallas_call(
        pointconv_kernel,
        out_shape=jax.ShapeDtypeStruct((cout, m_pad), jnp.float32),
        grid_spec=pltpu.PrefetchScalarGridSpec(
            num_scalar_prefetch=0,
            grid=(num_tiles,),
            in_specs=[
                pl.BlockSpec((cin_pad, k * tile_m), lambda i: (0, i)),
                pl.BlockSpec(w1t.shape, full),
                pl.BlockSpec(b1c.shape, full),
                pl.BlockSpec(w2t.shape, full),
                pl.BlockSpec(b2c.shape, full),
                pl.BlockSpec(w3t.shape, full),
                pl.BlockSpec(b3c.shape, full),
            ],
            out_specs=pl.BlockSpec((cout, tile_m), lambda i: (0, i)),
            scratch_shapes=[pltpu.VMEM((h2, k * tile_m), jnp.bfloat16)],
        ),
        compiler_params=pltpu.CompilerParams(
            dimension_semantics=("parallel",),
            vmem_limit_bytes=32 * 1024 * 1024),
        cost_estimate=cost,
    )(feat2d, w1t, b1c, w2t, b2c, w3t, b3c)


# ----------------------------------------------------------------------------
# Plain-JAX glue: farthest point sampling + radius (ball) query
# ----------------------------------------------------------------------------
def _fps_single(pos_b, m):
    """Deterministic FPS on one batch element, start index 0. pos_b: [Nb, 3]."""
    sel0 = jnp.zeros((m,), jnp.int32)
    d0 = jnp.sum((pos_b - pos_b[0]) ** 2, axis=-1)

    def body(i, carry):
        sel, d = carry
        nxt = jnp.argmax(d).astype(jnp.int32)
        sel = sel.at[i].set(nxt)
        d_new = jnp.sum((pos_b - pos_b[nxt]) ** 2, axis=-1)
        return sel, jnp.minimum(d, d_new)

    sel, _ = jax.lax.fori_loop(1, m, body, (sel0, d0))
    return sel


def fps(pos, batch, ratio, num_batches, per_batch):
    """torch_cluster.fps equivalent for sorted, equal-sized batches."""
    m_per_batch = int(np.ceil(ratio * per_batch))
    pos_b = pos.reshape(num_batches, per_batch, 3)
    local = jax.vmap(functools.partial(_fps_single, m=m_per_batch))(pos_b)
    offsets = (jnp.arange(num_batches, dtype=jnp.int32) * per_batch)[:, None]
    return (local + offsets).reshape(-1)


def radius_query(pos, batch, centers, center_batch, center_idx, r, max_neighbors):
    """For each center, up to `max_neighbors` points within radius r (same batch).
    Neighbors are taken in ascending source-index order (deterministic).
    Invalid slots are filled with the center's own index: whenever a slot is
    invalid (< max_neighbors hits) the center is guaranteed to already be among
    the valid slots (distance 0 <= r, same batch), so the duplicated self-edge
    leaves the max aggregation unchanged and no mask is needed downstream."""
    n = pos.shape[0]
    d2 = jnp.sum((centers[:, None, :] - pos[None, :, :]) ** 2, axis=-1)   # [M, N]
    ok = (d2 <= r * r) & (batch[None, :] == center_batch[:, None])
    keyed = jnp.where(ok, jnp.arange(n, dtype=jnp.int32), n)
    first = jnp.sort(keyed, axis=1)[:, :max_neighbors]                    # [M, K]
    valid = first < n
    nbr_idx = jnp.where(valid, first, center_idx[:, None].astype(jnp.int32))
    return nbr_idx


# ----------------------------------------------------------------------------
# SAModule forward
# ----------------------------------------------------------------------------
def sa_module_forward(x, pos, batch, *, ratio, r, params,
                      num_batches, per_batch, max_neighbors=32, tile_m=256):
    # 1. farthest point sampling
    idx = fps(pos, batch, ratio, num_batches, per_batch)
    centers = pos[idx]                  # [M, 3]
    center_batch = batch[idx]           # [M]

    # 2. radius (ball) query, max_num_neighbors=32 (invalid slots -> self-edge)
    k = max_neighbors
    nbr_idx = radius_query(pos, batch, centers, center_batch, idx, r, k)  # [M, K]

    # Tile sizing: lane tiles are multiples of 128; clamp tile_m so tiny inputs
    # still form a grid.  On v7x prefer >= 2 grid steps so the "parallel" axis
    # shards across both TensorCores (shrink tile_m rather than collapse grid).
    m = centers.shape[0]
    m_pad_min = _round_up(m, 128)
    tile_m = min(tile_m, m_pad_min)
    m_pad = _round_up(m, tile_m)
    num_tiles = m_pad // tile_m

    # 3. edge features concat([x_j, pos_j - pos_i]) built directly in the
    #    channels-on-sublanes / points-on-lanes layout expected by the kernel.
    nbr_km = nbr_idx.T                                    # [K, M]
    x_j = x[nbr_km]                                       # [K, M, F]
    rel = pos[nbr_km] - centers[None, :, :]               # [K, M, 3]
    feat = jnp.concatenate([x_j, rel], axis=-1)           # [K, M, Cin]
    cin = feat.shape[-1]
    cin_pad = _round_up(cin, 8)
    feat = feat.transpose(2, 0, 1)                        # [Cin, K, M]
    feat = jnp.pad(feat, ((0, cin_pad - cin), (0, 0), (0, m_pad - m)))
    feat = feat.reshape(cin_pad, k, num_tiles, tile_m).transpose(0, 2, 1, 3)
    feat2d = feat.reshape(cin_pad, num_tiles * k * tile_m).astype(jnp.bfloat16)

    # 4. PointConv MLP + max aggregation (Pallas kernel), transposed output.
    out_t = pointconv_pallas(feat2d, params, k=k, tile_m=tile_m)  # [Cout, M_pad]
    out = out_t[:, :m].T                                          # [M, Cout]

    return out, centers, center_batch


# ----------------------------------------------------------------------------
# Parameter init (deterministic, synthetic)
# ----------------------------------------------------------------------------
def init_mlp_params(key, cin, hidden, cout):
    k1, k2, k3 = jax.random.split(key, 3)
    def lin(kk, fan_in, fan_out):
        w = jax.random.normal(kk, (fan_in, fan_out), jnp.float32) / np.sqrt(fan_in)
        b = jnp.zeros((1, fan_out), jnp.float32)
        return w, b
    w1, b1 = lin(k1, cin, hidden)
    w2, b2 = lin(k2, hidden, hidden)
    w3, b3 = lin(k3, hidden, cout)
    return (w1, b1, w2, b2, w3, b3)


if __name__ == "__main__":
    key = jax.random.PRNGKey(0)
    k_pos, k_x, k_mlp = jax.random.split(key, 3)

    B, Nb, F = 2, 32, 4          # 2 point clouds, 32 points each, 4 features
    N = B * Nb
    ratio, r = 0.5, 0.4
    HIDDEN, COUT = 32, 64        # nn = MLP([F+3, 32, 32, 64])
    K = 32                       # max_num_neighbors

    pos = jax.random.uniform(k_pos, (N, 3), jnp.float32)
    x = jax.random.normal(k_x, (N, F), jnp.float32)
    batch = jnp.repeat(jnp.arange(B, dtype=jnp.int32), Nb)

    params = init_mlp_params(k_mlp, F + 3, HIDDEN, COUT)

    out_x, out_pos, out_batch = sa_module_forward(
        x, pos, batch, ratio=ratio, r=r, params=params,
        num_batches=B, per_batch=Nb, max_neighbors=K)
    jax.block_until_ready((out_x, out_pos, out_batch))

    # Reference check of the kernel hot path (pure jnp, same bf16 matmul inputs)
    idx = fps(pos, batch, ratio, B, Nb)
    centers = pos[idx]
    nbr_idx = radius_query(pos, batch, centers, batch[idx], idx, r, K)
    feat = jnp.concatenate(
        [x[nbr_idx], pos[nbr_idx] - centers[:, None, :]], -1)     # [M, K, Cin]
    w1, b1, w2, b2, w3, b3 = params
    def bdot(a, w):
        return jnp.dot(a.astype(jnp.bfloat16), w.astype(jnp.bfloat16),
                       preferred_element_type=jnp.float32)
    h = jnp.maximum(bdot(feat, w1) + b1, 0.0)
    h = jnp.maximum(bdot(h, w2) + b2, 0.0)
    h = jnp.maximum(bdot(h, w3) + b3, 0.0)                        # [M, K, Cout]
    ref = jnp.max(h, axis=1)                                      # max over neighbors
    np.testing.assert_allclose(np.asarray(out_x), np.asarray(ref),
                               rtol=2e-2, atol=2e-2)

    M = idx.shape[0]
    assert out_x.shape == (M, COUT)
    assert out_pos.shape == (M, 3)
    assert out_batch.shape == (M,)
    print("KERNEL_OK")
</pallas_src>

<mosaic_0001>
module attributes {stable_mosaic.version = 11 : i64} {
  func.func @pointconv_kernel(%arg0: i32, %arg1: memref<8x4096xbf16, #tpu.memory_space<vmem>>, %arg2: memref<32x8xbf16, #tpu.memory_space<vmem>>, %arg3: memref<32x1xf32, #tpu.memory_space<vmem>>, %arg4: memref<32x32xbf16, #tpu.memory_space<vmem>>, %arg5: memref<32x1xf32, #tpu.memory_space<vmem>>, %arg6: memref<64x32xbf16, #tpu.memory_space<vmem>>, %arg7: memref<64x1xf32, #tpu.memory_space<vmem>>, %arg8: memref<64x128xf32, #tpu.memory_space<vmem>>, %arg9: memref<32x4096xbf16, #tpu.memory_space<vmem>>) attributes {dimension_semantics = [#tpu.dimension_semantics<parallel>], iteration_bounds = array<i64: 1>, scalar_prefetch = 0 : i64, scratch_operands = 1 : i64, tpu.core_type = #tpu.core_type<tc>, window_params = [{transform_indices = @transform_0, window_bounds = array<i64: 8, 4096>}, {pipeline_mode = #tpu.pipeline_mode<synchronous>, transform_indices = @transform_1, window_bounds = array<i64: 32, 8>}, {pipeline_mode = #tpu.pipeline_mode<synchronous>, transform_indices = @transform_2, window_bounds = array<i64: 32, 1>}, {pipeline_mode = #tpu.pipeline_mode<synchronous>, transform_indices = @transform_3, window_bounds = array<i64: 32, 32>}, {pipeline_mode = #tpu.pipeline_mode<synchronous>, transform_indices = @transform_4, window_bounds = array<i64: 32, 1>}, {pipeline_mode = #tpu.pipeline_mode<synchronous>, transform_indices = @transform_5, window_bounds = array<i64: 64, 32>}, {pipeline_mode = #tpu.pipeline_mode<synchronous>, transform_indices = @transform_6, window_bounds = array<i64: 64, 1>}, {transform_indices = @transform_7, window_bounds = array<i64: 64, 128>}]} {
    %c0 = arith.constant 0 : index
    %c0_0 = arith.constant 0 : index
    %0 = vector.load %arg1[%c0, %c0_0] : memref<8x4096xbf16, #tpu.memory_space<vmem>>, vector<8x4096xbf16>
    %c0_1 = arith.constant 0 : index
    %c0_2 = arith.constant 0 : index
    %1 = vector.load %arg2[%c0_1, %c0_2] : memref<32x8xbf16, #tpu.memory_space<vmem>>, vector<32x8xbf16>
    %cst = arith.constant dense<0.000000e+00> : vector<32x4096xf32>
    %2 = tpu.matmul %1, %0, %cst {dimension_numbers = #tpu.dot_dimension_numbers<[1], [0], [0], [1], [0, 0, 1, 1], [], []>} : vector<32x8xbf16>, vector<8x4096xbf16>, vector<32x4096xf32> -> vector<32x4096xf32>
    %c0_3 = arith.constant 0 : index
    %c0_4 = arith.constant 0 : index
    %3 = vector.load %arg3[%c0_3, %c0_4] : memref<32x1xf32, #tpu.memory_space<vmem>>, vector<32x1xf32>
    %4 = vector.broadcast %3 : vector<32x1xf32> to vector<32x4096xf32>
    %5 = arith.addf %2, %4 : vector<32x4096xf32>
    %cst_5 = arith.constant 0.000000e+00 : f32
    %6 = vector.broadcast %cst_5 : f32 to vector<32x4096xf32>
    %7 = arith.maximumf %5, %6 : vector<32x4096xf32>
    %8 = arith.truncf %7 : vector<32x4096xf32> to vector<32x4096xbf16>
    %c0_6 = arith.constant 0 : index
    %c0_7 = arith.constant 0 : index
    %9 = vector.load %arg4[%c0_6, %c0_7] : memref<32x32xbf16, #tpu.memory_space<vmem>>, vector<32x32xbf16>
    %cst_8 = arith.constant dense<0.000000e+00> : vector<32x4096xf32>
    %10 = tpu.matmul %9, %8, %cst_8 {dimension_numbers = #tpu.dot_dimension_numbers<[1], [0], [0], [1], [0, 0, 1, 1], [], []>} : vector<32x32xbf16>, vector<32x4096xbf16>, vector<32x4096xf32> -> vector<32x4096xf32>
    %c0_9 = arith.constant 0 : index
    %c0_10 = arith.constant 0 : index
    %11 = vector.load %arg5[%c0_9, %c0_10] : memref<32x1xf32, #tpu.memory_space<vmem>>, vector<32x1xf32>
    %12 = vector.broadcast %11 : vector<32x1xf32> to vector<32x4096xf32>
    %13 = arith.addf %10, %12 : vector<32x4096xf32>
    %cst_11 = arith.constant 0.000000e+00 : f32
    %14 = vector.broadcast %cst_11 : f32 to vector<32x4096xf32>
    %15 = arith.maximumf %13, %14 : vector<32x4096xf32>
    %16 = arith.truncf %15 : vector<32x4096xf32> to vector<32x4096xbf16>
    %c0_12 = arith.constant 0 : index
    %c0_13 = arith.constant 0 : index
    %17 = vector.load %arg9[%c0_12, %c0_13] : memref<32x4096xbf16, #tpu.memory_space<vmem>>, vector<32x4096xbf16>
    tpu.vector_store %arg9[%c0_12, %c0_13], %16 {strides = array<i32>} : memref<32x4096xbf16, #tpu.memory_space<vmem>>, vector<32x4096xbf16>,
    %c0_14 = arith.constant 0 : index
    %c0_15 = arith.constant 0 : index
    %18 = vector.load %arg6[%c0_14, %c0_15] : memref<64x32xbf16, #tpu.memory_space<vmem>>, vector<64x32xbf16>
    %c0_16 = arith.constant 0 : index
    %c0_17 = arith.constant 0 : index
    %19 = vector.load %arg7[%c0_16, %c0_17] : memref<64x1xf32, #tpu.memory_space<vmem>>, vector<64x1xf32>
    %cst_18 = arith.constant 0xFF800000 : f32
    %20 = vector.broadcast %cst_18 : f32 to vector<64x128xf32>
    %c0_i32 = arith.constant 0 : i32
    %c32_i32 = arith.constant 32 : i32
    %21 = arith.addi %c0_i32, %c32_i32 : i32
    %c1_i32 = arith.constant 1 : i32
    %22 = scf.for %arg10 = %c0_i32 to %21 step %c1_i32 iter_args(%arg11 = %20) -> (vector<64x128xf32>)  : i32 {
      %c128_i32 = arith.constant 128 : i32
      %24 = arith.muli %arg10, %c128_i32 : i32
      %25 = tpu.assume_multiple %24, 128 : i32
      %c0_22 = arith.constant 0 : index
      %26 = arith.index_cast %25 : i32 to index
      %27 = vector.load %arg9[%c0_22, %26] : memref<32x4096xbf16, #tpu.memory_space<vmem>>, vector<32x128xbf16>
      %cst_23 = arith.constant dense<0.000000e+00> : vector<64x128xf32>
      %28 = tpu.matmul %18, %27, %cst_23 {dimension_numbers = #tpu.dot_dimension_numbers<[1], [0], [0], [1], [0, 0, 1, 1], [], []>} : vector<64x32xbf16>, vector<32x128xbf16>, vector<64x128xf32> -> vector<64x128xf32>
      %29 = vector.broadcast %19 : vector<64x1xf32> to vector<64x128xf32>
      %30 = arith.addf %28, %29 : vector<64x128xf32>
      %cst_24 = arith.constant 0.000000e+00 : f32
      %31 = vector.broadcast %cst_24 : f32 to vector<64x128xf32>
      %32 = arith.maximumf %30, %31 : vector<64x128xf32>
      %33 = arith.maximumf %arg11, %32 : vector<64x128xf32>
      scf.yield %33 : vector<64x128xf32>
    }
    %c32_i32_19 = arith.constant 32 : i32
    %c0_20 = arith.constant 0 : index
    %c0_21 = arith.constant 0 : index
    %23 = vector.load %arg8[%c0_20, %c0_21] : memref<64x128xf32, #tpu.memory_space<vmem>>, vector<64x128xf32>
    tpu.vector_store %arg8[%c0_20, %c0_21], %22 {strides = array<i32>} : memref<64x128xf32, #tpu.memory_space<vmem>>, vector<64x128xf32>,
    return
  }
  func.func @transform_0(%arg0: i32) -> (i32, i32) {
    %c0_i32 = arith.constant 0 : i32
    %c0_i32_0 = arith.constant 0 : i32
    return %c0_i32, %arg0 : i32, i32
  }
  func.func @transform_1(%arg0: i32) -> (i32, i32) {
    %c0_i32 = arith.constant 0 : i32
    %c0_i32_0 = arith.constant 0 : i32
    %c0_i32_1 = arith.constant 0 : i32
    return %c0_i32, %c0_i32_0 : i32, i32
  }
  func.func @transform_2(%arg0: i32) -> (i32, i32) {
    %c0_i32 = arith.constant 0 : i32
    %c0_i32_0 = arith.constant 0 : i32
    %c0_i32_1 = arith.constant 0 : i32
    return %c0_i32, %c0_i32_0 : i32, i32
  }
  func.func @transform_3(%arg0: i32) -> (i32, i32) {
    %c0_i32 = arith.constant 0 : i32
    %c0_i32_0 = arith.constant 0 : i32
    %c0_i32_1 = arith.constant 0 : i32
    return %c0_i32, %c0_i32_0 : i32, i32
  }
  func.func @transform_4(%arg0: i32) -> (i32, i32) {
    %c0_i32 = arith.constant 0 : i32
    %c0_i32_0 = arith.constant 0 : i32
    %c0_i32_1 = arith.constant 0 : i32
    return %c0_i32, %c0_i32_0 : i32, i32
  }
  func.func @transform_5(%arg0: i32) -> (i32, i32) {
    %c0_i32 = arith.constant 0 : i32
    %c0_i32_0 = arith.constant 0 : i32
    %c0_i32_1 = arith.constant 0 : i32
    return %c0_i32, %c0_i32_0 : i32, i32
  }
  func.func @transform_6(%arg0: i32) -> (i32, i32) {
    %c0_i32 = arith.constant 0 : i32
    %c0_i32_0 = arith.constant 0 : i32
    %c0_i32_1 = arith.constant 0 : i32
    return %c0_i32, %c0_i32_0 : i32, i32
  }
  func.func @transform_7(%arg0: i32) -> (i32, i32) {
    %c0_i32 = arith.constant 0 : i32
    %c0_i32_0 = arith.constant 0 : i32
    return %c0_i32, %arg0 : i32, i32
  }
}

</mosaic_0001>

<llo_original>
// kernel: tpu_custom_call.1
$region0: #{tpu_custom_call.1}
  #allocation0 [shape = 'u32[]', space=smem, size = 0x4, offset = 0x4, fixed_abs, tag = 'smem constant byte address 0x4 - core index']
  #allocation1 [shape = 'u32[144,128]{1,0:T(1,128)}', space=vmem, size = 0x12000, scoped, tag = 'internal scratch']
  #allocation2 [shape = 'bf16[32,4096]{1,0:T(16,128)(2,1)}', space=vmem, size = 0x40000, scoped, tag = 'scratch operand']
  %s0 = inlined_call_operand.vmem [shape: bf16[8,4096], index: 0, kind: input, shape index: {}]
  %s1 = inlined_call_operand.vmem [shape: bf16[32,8], index: 1, kind: input, shape index: {}]
  %s2 = inlined_call_operand.vmem [shape: f32[32,1], index: 2, kind: input, shape index: {}]
  %s3 = inlined_call_operand.vmem [shape: bf16[32,32], index: 3, kind: input, shape index: {}]
  %s4 = inlined_call_operand.vmem [shape: f32[32,1], index: 4, kind: input, shape index: {}]
  %s5 = inlined_call_operand.vmem [shape: bf16[64,32], index: 5, kind: input, shape index: {}]
  %s6 = inlined_call_operand.vmem [shape: f32[64,1], index: 6, kind: input, shape index: {}]
  %s7 = inlined_call_operand.hbm [shape: f32[64,128], index: 7, kind: output, shape index: {}]
  %s8 = sld [smem:[#allocation0]]
  $region45: #{tpu_custom_call.1} parent=0
    _
  %s10 = ssub.s32 1, %s8
  %s11 = scalar_select 0, %s10, %s8
  $region1: #{tpu_custom_call.1} parent=0
    #allocation3 [shape = 'u8[32768]{0}', space=vmem, size = 0x8000, scoped, tag = 'output window, operand 0, single buffered']
    #allocation4 [shape = 's32[1]{0}', space=sflag, size = 0x4, scoped, tag = 'scoped memory for tpu_custom_call.1']
    %12 = vsyncpa [#allocation4], 0
    // Predicated region
    $region2: #{tpu_custom_call.1} parent=1 // pred_check
      _
    $region3: #{tpu_custom_call.1} parent=1 // pred_check_branch
      %14 = sbr.rel (0) target = $region5
    $region4: #{tpu_custom_call.1} parent=1 // pred_region
      _
    $region5: #{tpu_custom_call.1} parent=1 // pred_fallthru
      _
    // Predicated region
    $region6: #{tpu_custom_call.1} parent=1 // pred_check
      _
    $region7: #{tpu_custom_call.1} parent=1 // pred_check_branch
      %16 = sbr.rel (0) target = $region9
    $region8: #{tpu_custom_call.1} parent=1 // pred_region
      _
    $region9: #{tpu_custom_call.1} parent=1 // pred_fallthru
      _
    // Predicated region
    $region10: #{tpu_custom_call.1} parent=1 // pred_check
      _
    $region11: #{tpu_custom_call.1} parent=1 // pred_check_branch
      %18 = sbr.rel (0) target = $region13
    $region12: #{tpu_custom_call.1} parent=1 // pred_region
      _
    $region13: #{tpu_custom_call.1} parent=1 // pred_fallthru
      _
    // Predicated region
    $region14: #{tpu_custom_call.1} parent=1 // pred_check
      _
    $region15: #{tpu_custom_call.1} parent=1 // pred_check_branch
      %20 = sbr.rel (0) target = $region17
    $region16: #{tpu_custom_call.1} parent=1 // pred_region
      _
    $region17: #{tpu_custom_call.1} parent=1 // pred_fallthru
      _
    // Predicated region
    $region18: #{tpu_custom_call.1} parent=1 // pred_check
      _
    $region19: #{tpu_custom_call.1} parent=1 // pred_check_branch
      %22 = sbr.rel (0) target = $region21
    $region20: #{tpu_custom_call.1} parent=1 // pred_region
      _
    $region21: #{tpu_custom_call.1} parent=1 // pred_fallthru
      _
    // Predicated region
    $region22: #{tpu_custom_call.1} parent=1 // pred_check
      _
    $region23: #{tpu_custom_call.1} parent=1 // pred_check_branch
      %24 = sbr.rel (0) target = $region25
    $region24: #{tpu_custom_call.1} parent=1 // pred_region
      _
    $region25: #{tpu_custom_call.1} parent=1 // pred_fallthru
      _
    // Predicated region
    $region26: #{tpu_custom_call.1} parent=1 // pred_check
      _
    $region27: #{tpu_custom_call.1} parent=1 // pred_check_branch
      %26 = sbr.rel (0) target = $region29
    $region28: #{tpu_custom_call.1} parent=1 // pred_region
      _
    $region29: #{tpu_custom_call.1} parent=1 // pred_fallthru
      _
    %v28 = vld [vmem:[%s0] sm:$0xff]
    %v29 = vld [vmem:[%s0 + $0x8] sm:$0xff]
    %v30 = vld [vmem:[%s0 + $0x10] sm:$0xff]
    %v31 = vld [vmem:[%s0 + $0x18] sm:$0xff]
    %v32 = vld [vmem:[%s0 + $0x20] sm:$0xff]
    %v33 = vld [vmem:[%s0 + $0x28] sm:$0xff]
    %v34 = vld [vmem:[%s0 + $0x30] sm:$0xff]
    %v35 = vld [vmem:[%s0 + $0x38] sm:$0xff]
    %v36 = vld [vmem:[%s0 + $0x40] sm:$0xff]
    %v37 = vld [vmem:[%s0 + $0x48] sm:$0xff]
    %v38 = vld [vmem:[%s0 + $0x50] sm:$0xff]
    %v39 = vld [vmem:[%s0 + $0x58] sm:$0xff]
    %v40 = vld [vmem:[%s0 + $0x60] sm:$0xff]
    %v41 = vld [vmem:[%s0 + $0x68] sm:$0xff]
    %v42 = vld [vmem:[%s0 + $0x70] sm:$0xff]
    %v43 = vld [vmem:[%s0 + $0x78] sm:$0xff]
    %v44 = vld [vmem:[%s1] sm:$0xf]
    %v45 = vld [vmem:[%s1 + $0x4] sm:$0xf]
    %v46 = vld [vmem:[%s1 + $0x8] sm:$0xf]
    %v47 = vld [vmem:[%s1 + $0xc] sm:$0xf]
    %v48 = vld [vmem:[%s2] sm:$0xff]
    %v49 = vld [vmem:[%s2 + $0x8] sm:$0xff]
    %v50 = vld [vmem:[%s2 + $0x10] sm:$0xff]
    %v51 = vld [vmem:[%s2 + $0x18] sm:$0xff]
    %53 = vset.pattern.permute.xlu0 0
    %54 = vperm.xlu0 %53, %v48
    %v55 = vpop.permute.xlu0 %54
    %58 = vset.pattern.permute.xlu0 0
    %59 = vperm.xlu0 %58, %v49
    %v60 = vpop.permute.xlu0 %59
    %63 = vset.pattern.permute.xlu0 0
    %64 = vperm.xlu0 %63, %v50
    %v65 = vpop.permute.xlu0 %64
    %68 = vset.pattern.permute.xlu0 0
    %69 = vperm.xlu0 %68, %v51
    %v70 = vpop.permute.xlu0 %69
    %v76 = vunpack.c.l.b16 %v44
    %v77 = vunpack.c.l.b16 %v45
    %v78 = vunpack.c.l.b16 %v46
    %v79 = vunpack.c.l.b16 %v47
    %v80 = vpack.c.b16 %v77, %v76
    %v81 = vpack.c.b16 %v79, %v78
    %v98 = vunpack.c.l.b16 %v28
    %v99 = vunpack.c.h.b16 %v28
    %v100 = vunpack.c.l.b16 %v29
    %v101 = vunpack.c.h.b16 %v29
    %v102 = vunpack.c.l.b16 %v30
    %v103 = vunpack.c.h.b16 %v30
    %v104 = vunpack.c.l.b16 %v31
    %v105 = vunpack.c.h.b16 %v31
    %v106 = vunpack.c.l.b16 %v32
    %v107 = vunpack.c.h.b16 %v32
    %v108 = vunpack.c.l.b16 %v33
    %v109 = vunpack.c.h.b16 %v33
    %v110 = vunpack.c.l.b16 %v34
    %v111 = vunpack.c.h.b16 %v34
    %v112 = vunpack.c.l.b16 %v35
    %v113 = vunpack.c.h.b16 %v35
    %v114 = vunpack.c.l.b16 %v36
    %v115 = vunpack.c.h.b16 %v36
    %v116 = vunpack.c.l.b16 %v37
    %v117 = vunpack.c.h.b16 %v37
    %v118 = vunpack.c.l.b16 %v38
    %v119 = vunpack.c.h.b16 %v38
    %v120 = vunpack.c.l.b16 %v39
    %v121 = vunpack.c.h.b16 %v39
    %v122 = vunpack.c.l.b16 %v40
    %v123 = vunpack.c.h.b16 %v40
    %v124 = vunpack.c.l.b16 %v41
    %v125 = vunpack.c.h.b16 %v41
    %v126 = vunpack.c.l.b16 %v42
    %v127 = vunpack.c.h.b16 %v42
    %v128 = vunpack.c.l.b16 %v43
    %v129 = vunpack.c.h.b16 %v43
    %v130 = vpack.c.b16 %v98, %v98
    %v131 = vpack.c.b16 %v99, %v99
    %v132 = vpack.c.b16 %v100, %v100
    %v133 = vpack.c.b16 %v101, %v101
    %v134 = vpack.c.b16 %v102, %v102
    %v135 = vpack.c.b16 %v103, %v103
    %v136 = vpack.c.b16 %v104, %v104
    %v137 = vpack.c.b16 %v105, %v105
    %v138 = vpack.c.b16 %v106, %v106
    %v139 = vpack.c.b16 %v107, %v107
    %v140 = vpack.c.b16 %v108, %v108
    %v141 = vpack.c.b16 %v109, %v109
    %v142 = vpack.c.b16 %v110, %v110
    %v143 = vpack.c.b16 %v111, %v111
    %v144 = vpack.c.b16 %v112, %v112
    %v145 = vpack.c.b16 %v113, %v113
    %v146 = vpack.c.b16 %v114, %v114
    %v147 = vpack.c.b16 %v115, %v115
    %v148 = vpack.c.b16 %v116, %v116
    %v149 = vpack.c.b16 %v117, %v117
    %v150 = vpack.c.b16 %v118, %v118
    %v151 = vpack.c.b16 %v119, %v119
    %v152 = vpack.c.b16 %v120, %v120
    %v153 = vpack.c.b16 %v121, %v121
    %v154 = vpack.c.b16 %v122, %v122
    %v155 = vpack.c.b16 %v123, %v123
    %v156 = vpack.c.b16 %v124, %v124
    %v157 = vpack.c.b16 %v125, %v125
    %v158 = vpack.c.b16 %v126, %v126
    %v159 = vpack.c.b16 %v127, %v127
    %v160 = vpack.c.b16 %v128, %v128
    %v161 = vpack.c.b16 %v129, %v129
    %vm162 = vcmask 64512
    %v164 = vsel %vm162, %v80, 0
    %v167 = vsel %vm162, %v81, 0
    %vm169 = vcmask 1043456
    %v171 = vsel %vm169, %v130, 0
    %v174 = vsel %vm169, %v131, 0
    %v177 = vsel %vm169, %v132, 0
    %v180 = vsel %vm169, %v133, 0
    %v183 = vsel %vm169, %v134, 0
    %v186 = vsel %vm169, %v135, 0
    %v189 = vsel %vm169, %v136, 0
    %v192 = vsel %vm169, %v137, 0
    %v195 = vsel %vm169, %v138, 0
    %v198 = vsel %vm169, %v139, 0
    %v201 = vsel %vm169, %v140, 0
    %v204 = vsel %vm169, %v141, 0
    %v207 = vsel %vm169, %v142, 0
    %v210 = vsel %vm169, %v143, 0
    %v213 = vsel %vm169, %v144, 0
    %v216 = vsel %vm169, %v145, 0
    %v219 = vsel %vm169, %v146, 0
    %v222 = vsel %vm169, %v147, 0
    %v225 = vsel %vm169, %v148, 0
    %v228 = vsel %vm169, %v149, 0
    %v231 = vsel %vm169, %v150, 0
    %v234 = vsel %vm169, %v151, 0
    %v237 = vsel %vm169, %v152, 0
    %v240 = vsel %vm169, %v153, 0
    %v243 = vsel %vm169, %v154, 0
    %v246 = vsel %vm169, %v155, 0
    %v249 = vsel %vm169, %v156, 0
    %v252 = vsel %vm169, %v157, 0
    %v255 = vsel %vm169, %v158, 0
    %v258 = vsel %vm169, %v159, 0
    %v261 = vsel %vm169, %v160, 0
    %v264 = vsel %vm169, %v161, 0
    %266 = vmatprep.subr.bf16.mxu0 %v174
    %267 = vmatpush1.bf16.msra.mxu0 %v171
    %268 = vmatprep.subr.bf16.mxu0 0
    %269 = vmatpush1.bf16.msra.mxu0 0
    %270 = vmatprep.subr.bf16.mxu0 0
    %271 = vmatpush1.bf16.msra.mxu0 0
    %272 = vmatprep.subr.bf16.mxu0 0
    %273 = vmatpush1.bf16.msra.mxu0 0
    %274 = vmatprep.subr.bf16.mxu0 0
    %275 = vmatpush1.bf16.msra.mxu0 0
    %276 = vmatprep.subr.bf16.mxu0 0
    %277 = vmatpush1.bf16.msra.mxu0 0
    %278 = vmatprep.subr.bf16.mxu0 0
    %279 = vmatpush1.bf16.msra.mxu0 0
    %280 = vmatprep.subr.bf16.mxu0 0
    %281 = vmatpush1.bf16.msra.mxu0 0
    %282 = vmatprep.subr.bf16.mxu0 0
    %283 = vmatpush1.bf16.msra.mxu0 0
    %284 = vmatprep.subr.bf16.mxu0 0
    %285 = vmatpush1.bf16.msra.mxu0 0
    %286 = vmatprep.subr.bf16.mxu0 0
    %287 = vmatpush1.bf16.msra.mxu0 0
    %288 = vmatprep.subr.bf16.mxu0 0
    %289 = vmatpush1.bf16.msra.mxu0 0
    %290 = vmatprep.subr.bf16.mxu0 0
    %291 = vmatpush1.bf16.msra.mxu0 0
    %292 = vmatprep.subr.bf16.mxu0 0
    %293 = vmatpush1.bf16.msra.mxu0 0
    %294 = vmatprep.subr.bf16.mxu0 0
    %295 = vmatpush1.bf16.msra.mxu0 0
    %296 = vmatprep.subr.bf16.mxu0 0
    %297 = vmatpush1.bf16.msra.mxu0 0
    %298 = vmatprep.mubr.bf16.mxu0 0
    %299 = vmatmul.mubr.bf16.gmra.mrb[0].mxu0 %v164
    %v300 = vpop.f32.mrb[0].mxu0
    %v301 = vadd.f32 %v55, %v300
    %v302 = vpop.f32.mrb[0].mxu0
    %v303 = vadd.f32 %v55, %v302
    %v304 = vpop.f32.mrb[0].mxu0
    %v305 = vadd.f32 %v60, %v304
    %v306 = vpop.f32.mrb[0].mxu0
    %v307 = vadd.f32 %v60, %v306
    %308 = vmatprep.mubr.bf16.mxu0 0
    %309 = vmatmul.mubr.bf16.gmra.mrb[0].mxu0 %v167
    %v310 = vpop.f32.mrb[0].mxu0
    %v311 = vadd.f32 %v65, %v310
    %v312 = vpop.f32.mrb[0].mxu0
    %v313 = vadd.f32 %v65, %v312
    %v314 = vpop.f32.mrb[0].mxu0
    %v315 = vadd.f32 %v70, %v314
    %v316 = vpop.f32.mrb[0].mxu0
    %v317 = vadd.f32 %v70, %v316
    %318 = vdwg.mxu0
    %319 = vmatprep.subr.bf16.mxu0 %v180
    %320 = vmatpush1.bf16.msra.mxu0 %v177
    %321 = vmatprep.subr.bf16.mxu0 0
    %322 = vmatpush1.bf16.msra.mxu0 0
    %323 = vmatprep.subr.bf16.mxu0 0
    %324 = vmatpush1.bf16.msra.mxu0 0
    %325 = vmatprep.subr.bf16.mxu0 0
    %326 = vmatpush1.bf16.msra.mxu0 0
    %327 = vmatprep.subr.bf16.mxu0 0
    %328 = vmatpush1.bf16.msra.mxu0 0
    %329 = vmatprep.subr.bf16.mxu0 0
    %330 = vmatpush1.bf16.msra.mxu0 0
    %331 = vmatprep.subr.bf16.mxu0 0
    %332 = vmatpush1.bf16.msra.mxu0 0
    %333 = vmatprep.subr.bf16.mxu0 0
    %334 = vmatpush1.bf16.msra.mxu0 0
    %335 = vmatprep.subr.bf16.mxu0 0
    %336 = vmatpush1.bf16.msra.mxu0 0
    %337 = vmatprep.subr.bf16.mxu0 0
    %338 = vmatpush1.bf16.msra.mxu0 0
    %339 = vmatprep.subr.bf16.mxu0 0
    %340 = vmatpush1.bf16.msra.mxu0 0
    %341 = vmatprep.subr.bf16.mxu0 0
    %342 = vmatpush1.bf16.msra.mxu0 0
    %343 = vmatprep.subr.bf16.mxu0 0
    %344 = vmatpush1.bf16.msra.mxu0 0
    %345 = vmatprep.subr.bf16.mxu0 0
    %346 = vmatpush1.bf16.msra.mxu0 0
    %347 = vmatprep.subr.bf16.mxu0 0
    %348 = vmatpush1.bf16.msra.mxu0 0
    %349 = vmatprep.subr.bf16.mxu0 0
    %350 = vmatpush1.bf16.msra.mxu0 0
    %351 = vmatprep.mubr.bf16.mxu0 0
    %352 = vmatmul.mubr.bf16.gmra.mrb[0].mxu0 %v164
    %v353 = vpop.f32.mrb[0].mxu0
    %v354 = vadd.f32 %v55, %v353
    %v355 = vpop.f32.mrb[0].mxu0
    %v356 = vadd.f32 %v55, %v355
    %v357 = vpop.f32.mrb[0].mxu0
    %v358 = vadd.f32 %v60, %v357
    %v359 = vpop.f32.mrb[0].mxu0
    %v360 = vadd.f32 %v60, %v359
    %361 = vmatprep.mubr.bf16.mxu0 0
    %362 = vmatmul.mubr.bf16.gmra.mrb[0].mxu0 %v167
    %v363 = vpop.f32.mrb[0].mxu0
    %v364 = vadd.f32 %v65, %v363
    %v365 = vpop.f32.mrb[0].mxu0
    %v366 = vadd.f32 %v65, %v365
    %v367 = vpop.f32.mrb[0].mxu0
    %v368 = vadd.f32 %v70, %v367
    %v369 = vpop.f32.mrb[0].mxu0
    %v370 = vadd.f32 %v70, %v369
    %371 = vdwg.mxu0
    %372 = vmatprep.subr.bf16.mxu0 %v186
    %373 = vmatpush1.bf16.msra.mxu0 %v183
    %374 = vmatprep.subr.bf16.mxu0 0
    %375 = vmatpush1.bf16.msra.mxu0 0
    %376 = vmatprep.subr.bf16.mxu0 0
    %377 = vmatpush1.bf16.msra.mxu0 0
    %378 = vmatprep.subr.bf16.mxu0 0
    %379 = vmatpush1.bf16.msra.mxu0 0
    %380 = vmatprep.subr.bf16.mxu0 0
    %381 = vmatpush1.bf16.msra.mxu0 0
    %382 = vmatprep.subr.bf16.mxu0 0
    %383 = vmatpush1.bf16.msra.mxu0 0
    %384 = vmatprep.subr.bf16.mxu0 0
    %385 = vmatpush1.bf16.msra.mxu0 0
    %386 = vmatprep.subr.bf16.mxu0 0
    %387 = vmatpush1.bf16.msra.mxu0 0
    %388 = vmatprep.subr.bf16.mxu0 0
    %389 = vmatpush1.bf16.msra.mxu0 0
    %390 = vmatprep.subr.bf16.mxu0 0
    %391 = vmatpush1.bf16.msra.mxu0 0
    %392 = vmatprep.subr.bf16.mxu0 0
    %393 = vmatpush1.bf16.msra.mxu0 0
    %394 = vmatprep.subr.bf16.mxu0 0
    %395 = vmatpush1.bf16.msra.mxu0 0
    %396 = vmatprep.subr.bf16.mxu0 0
    %397 = vmatpush1.bf16.msra.mxu0 0
    %398 = vmatprep.subr.bf16.mxu0 0
    %399 = vmatpush1.bf16.msra.mxu0 0
    %400 = vmatprep.subr.bf16.mxu0 0
    %401 = vmatpush1.bf16.msra.mxu0 0
    %402 = vmatprep.subr.bf16.mxu0 0
    %403 = vmatpush1.bf16.msra.mxu0 0
    %404 = vmatprep.mubr.bf16.mxu0 0
    %405 = vmatmul.mubr.bf16.gmra.mrb[0].mxu0 %v164
    %v406 = vpop.f32.mrb[0].mxu0
    %v407 = vadd.f32 %v55, %v406
    %v408 = vpop.f32.mrb[0].mxu0
    %v409 = vadd.f32 %v55, %v408
    %v410 = vpop.f32.mrb[0].mxu0
    %v411 = vadd.f32 %v60, %v410
    %v412 = vpop.f32.mrb[0].mxu0
    %v413 = vadd.f32 %v60, %v412
    %414 = vmatprep.mubr.bf16.mxu0 0
    %415 = vmatmul.mubr.bf16.gmra.mrb[0].mxu0 %v167
    %v416 = vpop.f32.mrb[0].mxu0
    %v417 = vadd.f32 %v65, %v416
    %v418 = vpop.f32.mrb[0].mxu0
    %v419 = vadd.f32 %v65, %v418
    %v420 = vpop.f32.mrb[0].mxu0
    %v421 = vadd.f32 %v70, %v420
    %v422 = vpop.f32.mrb[0].mxu0
    %v423 = vadd.f32 %v70, %v422
    %424 = vdwg.mxu0
    %425 = vmatprep.subr.bf16.mxu0 %v192
    %426 = vmatpush1.bf16.msra.mxu0 %v189
    %427 = vmatprep.subr.bf16.mxu0 0
    %428 = vmatpush1.bf16.msra.mxu0 0
    %429 = vmatprep.subr.bf16.mxu0 0
    %430 = vmatpush1.bf16.msra.mxu0 0
    %431 = vmatprep.subr.bf16.mxu0 0
    %432 = vmatpush1.bf16.msra.mxu0 0
    %433 = vmatprep.subr.bf16.mxu0 0
    %434 = vmatpush1.bf16.msra.mxu0 0
    %435 = vmatprep.subr.bf16.mxu0 0
    %436 = vmatpush1.bf16.msra.mxu0 0
    %437 = vmatprep.subr.bf16.mxu0 0
    %438 = vmatpush1.bf16.msra.mxu0 0
    %439 = vmatprep.subr.bf16.mxu0 0
    %440 = vmatpush1.bf16.msra.mxu0 0
    %441 = vmatprep.subr.bf16.mxu0 0
    %442 = vmatpush1.bf16.msra.mxu0 0
    %443 = vmatprep.subr.bf16.mxu0 0
    %444 = vmatpush1.bf16.msra.mxu0 0
    %445 = vmatprep.subr.bf16.mxu0 0
    %446 = vmatpush1.bf16.msra.mxu0 0
    %447 = vmatprep.subr.bf16.mxu0 0
    %448 = vmatpush1.bf16.msra.mxu0 0
    %449 = vmatprep.subr.bf16.mxu0 0
    %450 = vmatpush1.bf16.msra.mxu0 0
    %451 = vmatprep.subr.bf16.mxu0 0
    %452 = vmatpush1.bf16.msra.mxu0 0
    %453 = vmatprep.subr.bf16.mxu0 0
    %454 = vmatpush1.bf16.msra.mxu0 0
    %455 = vmatprep.subr.bf16.mxu0 0
    %456 = vmatpush1.bf16.msra.mxu0 0
    %457 = vmatprep.mubr.bf16.mxu0 0
    %458 = vmatmul.mubr.bf16.gmra.mrb[0].mxu0 %v164
    %v459 = vpop.f32.mrb[0].mxu0
    %v460 = vadd.f32 %v55, %v459
    %v461 = vpop.f32.mrb[0].mxu0
    %v462 = vadd.f32 %v55, %v461
    %v463 = vpop.f32.mrb[0].mxu0
    %v464 = vadd.f32 %v60, %v463
    %v465 = vpop.f32.mrb[0].mxu0
    %v466 = vadd.f32 %v60, %v465
    %467 = vmatprep.mubr.bf16.mxu0 0
    %468 = vmatmul.mubr.bf16.gmra.mrb[0].mxu0 %v167
    %v469 = vpop.f32.mrb[0].mxu0
    %v470 = vadd.f32 %v65, %v469
    %v471 = vpop.f32.mrb[0].mxu0
    %v472 = vadd.f32 %v65, %v471
    %v473 = vpop.f32.mrb[0].mxu0
    %v474 = vadd.f32 %v70, %v473
    %v475 = vpop.f32.mrb[0].mxu0
    %v476 = vadd.f32 %v70, %v475
    %477 = vdwg.mxu0
    %478 = vmatprep.subr.bf16.mxu0 %v198
    %479 = vmatpush1.bf16.msra.mxu0 %v195
    %480 = vmatprep.subr.bf16.mxu0 0
    %481 = vmatpush1.bf16.msra.mxu0 0
    %482 = vmatprep.subr.bf16.mxu0 0
    %483 = vmatpush1.bf16.msra.mxu0 0
    %484 = vmatprep.subr.bf16.mxu0 0
    %485 = vmatpush1.bf16.msra.mxu0 0
    %486 = vmatprep.subr.bf16.mxu0 0
    %487 = vmatpush1.bf16.msra.mxu0 0
    %488 = vmatprep.subr.bf16.mxu0 0
    %489 = vmatpush1.bf16.msra.mxu0 0
    %490 = vmatprep.subr.bf16.mxu0 0
    %491 = vmatpush1.bf16.msra.mxu0 0
    %492 = vmatprep.subr.bf16.mxu0 0
    %493 = vmatpush1.bf16.msra.mxu0 0
    %494 = vmatprep.subr.bf16.mxu0 0
    %495 = vmatpush1.bf16.msra.mxu0 0
    %496 = vmatprep.subr.bf16.mxu0 0
    %497 = vmatpush1.bf16.msra.mxu0 0
    %498 = vmatprep.subr.bf16.mxu0 0
    %499 = vmatpush1.bf16.msra.mxu0 0
    %500 = vmatprep.subr.bf16.mxu0 0
    %501 = vmatpush1.bf16.msra.mxu0 0
    %502 = vmatprep.subr.bf16.mxu0 0
    %503 = vmatpush1.bf16.msra.mxu0 0
    %504 = vmatprep.subr.bf16.mxu0 0
    %505 = vmatpush1.bf16.msra.mxu0 0
    %506 = vmatprep.subr.bf16.mxu0 0
    %507 = vmatpush1.bf16.msra.mxu0 0
    %508 = vmatprep.subr.bf16.mxu0 0
    %509 = vmatpush1.bf16.msra.mxu0 0
    %510 = vmatprep.mubr.bf16.mxu0 0
    %511 = vmatmul.mubr.bf16.gmra.mrb[0].mxu0 %v164
    %v512 = vpop.f32.mrb[0].mxu0
    %v513 = vadd.f32 %v55, %v512
    %v514 = vpop.f32.mrb[0].mxu0
    %v515 = vadd.f32 %v55, %v514
    %v516 = vpop.f32.mrb[0].mxu0
    %v517 = vadd.f32 %v60, %v516
    %v518 = vpop.f32.mrb[0].mxu0
    %v519 = vadd.f32 %v60, %v518
    %520 = vmatprep.mubr.bf16.mxu0 0
    %521 = vmatmul.mubr.bf16.gmra.mrb[0].mxu0 %v167
    %v522 = vpop.f32.mrb[0].mxu0
    %v523 = vadd.f32 %v65, %v522
    %v524 = vpop.f32.mrb[0].mxu0
    %v525 = vadd.f32 %v65, %v524
    %v526 = vpop.f32.mrb[0].mxu0
    %v527 = vadd.f32 %v70, %v526
    %v528 = vpop.f32.mrb[0].mxu0
    %v529 = vadd.f32 %v70, %v528
    %530 = vdwg.mxu0
    %531 = vmatprep.subr.bf16.mxu0 %v204
    %532 = vmatpush1.bf16.msra.mxu0 %v201
    %533 = vmatprep.subr.bf16.mxu0 0
    %534 = vmatpush1.bf16.msra.mxu0 0
    %535 = vmatprep.subr.bf16.mxu0 0
    %536 = vmatpush1.bf16.msra.mxu0 0
    %537 = vmatprep.subr.bf16.mxu0 0
    %538 = vmatpush1.bf16.msra.mxu0 0
    %539 = vmatprep.subr.bf16.mxu0 0
    %540 = vmatpush1.bf16.msra.mxu0 0
    %541 = vmatprep.subr.bf16.mxu0 0
    %542 = vmatpush1.bf16.msra.mxu0 0
    %543 = vmatprep.subr.bf16.mxu0 0
    %544 = vmatpush1.bf16.msra.mxu0 0
    %545 = vmatprep.subr.bf16.mxu0 0
    %546 = vmatpush1.bf16.msra.mxu0 0
    %547 = vmatprep.subr.bf16.mxu0 0
    %548 = vmatpush1.bf16.msra.mxu0 0
    %549 = vmatprep.subr.bf16.mxu0 0
    %550 = vmatpush1.bf16.msra.mxu0 0
    %551 = vmatprep.subr.bf16.mxu0 0
    %552 = vmatpush1.bf16.msra.mxu0 0
    %553 = vmatprep.subr.bf16.mxu0 0
    %554 = vmatpush1.bf16.msra.mxu0 0
    %555 = vmatprep.subr.bf16.mxu0 0
    %556 = vmatpush1.bf16.msra.mxu0 0
    %557 = vmatprep.subr.bf16.mxu0 0
    %558 = vmatpush1.bf16.msra.mxu0 0
    %559 = vmatprep.subr.bf16.mxu0 0
    %560 = vmatpush1.bf16.msra.mxu0 0
    %561 = vmatprep.subr.bf16.mxu0 0
    %562 = vmatpush1.bf16.msra.mxu0 0
    %563 = vmatprep.mubr.bf16.mxu0 0
    %564 = vmatmul.mubr.bf16.gmra.mrb[0].mxu0 %v164
    %v565 = vpop.f32.mrb[0].mxu0
    %v566 = vadd.f32 %v55, %v565
    %v567 = vpop.f32.mrb[0].mxu0
    %v568 = vadd.f32 %v55, %v567
    %v569 = vpop.f32.mrb[0].mxu0
    %v570 = vadd.f32 %v60, %v569
    %v571 = vpop.f32.mrb[0].mxu0
    %v572 = vadd.f32 %v60, %v571
    %573 = vmatprep.mubr.bf16.mxu0 0
    %574 = vmatmul.mubr.bf16.gmra.mrb[0].mxu0 %v167
    %v575 = vpop.f32.mrb[0].mxu0
    %v576 = vadd.f32 %v65, %v575
    %v577 = vpop.f32.mrb[0].mxu0
    %v578 = vadd.f32 %v65, %v577
    %v579 = vpop.f32.mrb[0].mxu0
    %v580 = vadd.f32 %v70, %v579
    %v581 = vpop.f32.mrb[0].mxu0
    %v582 = vadd.f32 %v70, %v581
    %583 = vdwg.mxu0
    %584 = vmatprep.subr.bf16.mxu0 %v210
    %585 = vmatpush1.bf16.msra.mxu0 %v207
    %586 = vmatprep.subr.bf16.mxu0 0
    %587 = vmatpush1.bf16.msra.mxu0 0
    %588 = vmatprep.subr.bf16.mxu0 0
    %589 = vmatpush1.bf16.msra.mxu0 0
    %590 = vmatprep.subr.bf16.mxu0 0
    %591 = vmatpush1.bf16.msra.mxu0 0
    %592 = vmatprep.subr.bf16.mxu0 0
    %593 = vmatpush1.bf16.msra.mxu0 0
    %594 = vmatprep.subr.bf16.mxu0 0
    %595 = vmatpush1.bf16.msra.mxu0 0
    %596 = vmatprep.subr.bf16.mxu0 0
    %597 = vmatpush1.bf16.msra.mxu0 0
    %598 = vmatprep.subr.bf16.mxu0 0
    %599 = vmatpush1.bf16.msra.mxu0 0
    %600 = vmatprep.subr.bf16.mxu0 0
    %601 = vmatpush1.bf16.msra.mxu0 0
    %602 = vmatprep.subr.bf16.mxu0 0
    %603 = vmatpush1.bf16.msra.mxu0 0
    %604 = vmatprep.subr.bf16.mxu0 0
    %605 = vmatpush1.bf16.msra.mxu0 0
    %606 = vmatprep.subr.bf16.mxu0 0
    %607 = vmatpush1.bf16.msra.mxu0 0
    %608 = vmatprep.subr.bf16.mxu0 0
    %609 = vmatpush1.bf16.msra.mxu0 0
    %610 = vmatprep.subr.bf16.mxu0 0
    %611 = vmatpush1.bf16.msra.mxu0 0
    %612 = vmatprep.subr.bf16.mxu0 0
    %613 = vmatpush1.bf16.msra.mxu0 0
    %614 = vmatprep.subr.bf16.mxu0 0
    %615 = vmatpush1.bf16.msra.mxu0 0
    %616 = vmatprep.mubr.bf16.mxu0 0
    %617 = vmatmul.mubr.bf16.gmra.mrb[0].mxu0 %v164
    %v618 = vpop.f32.mrb[0].mxu0
    %v619 = vadd.f32 %v55, %v618
    %v620 = vpop.f32.mrb[0].mxu0
    %v621 = vadd.f32 %v55, %v620
    %v622 = vpop.f32.mrb[0].mxu0
    %v623 = vadd.f32 %v60, %v622
    %v624 = vpop.f32.mrb[0].mxu0
    %v625 = vadd.f32 %v60, %v624
    %626 = vmatprep.mubr.bf16.mxu0 0
    %627 = vmatmul.mubr.bf16.gmra.mrb[0].mxu0 %v167
    %v628 = vpop.f32.mrb[0].mxu0
    %v629 = vadd.f32 %v65, %v628
    %v630 = vpop.f32.mrb[0].mxu0
    %v631 = vadd.f32 %v65, %v630
    %v632 = vpop.f32.mrb[0].mxu0
    %v633 = vadd.f32 %v70, %v632
    %v634 = vpop.f32.mrb[0].mxu0
    %v635 = vadd.f32 %v70, %v634
    %636 = vdwg.mxu0
    %637 = vmatprep.subr.bf16.mxu0 %v216
    %638 = vmatpush1.bf16.msra.mxu0 %v213
    %639 = vmatprep.subr.bf16.mxu0 0
    %640 = vmatpush1.bf16.msra.mxu0 0
    %641 = vmatprep.subr.bf16.mxu0 0
    %642 = vmatpush1.bf16.msra.mxu0 0
    %643 = vmatprep.subr.bf16.mxu0 0
    %644 = vmatpush1.bf16.msra.mxu0 0
    %645 = vmatprep.subr.bf16.mxu0 0
    %646 = vmatpush1.bf16.msra.mxu0 0
    %647 = vmatprep.subr.bf16.mxu0 0
    %648 = vmatpush1.bf16.msra.mxu0 0
    %649 = vmatprep.subr.bf16.mxu0 0
    %650 = vmatpush1.bf16.msra.mxu0 0
    %651 = vmatprep.subr.bf16.mxu0 0
    %652 = vmatpush1.bf16.msra.mxu0 0
    %653 = vmatprep.subr.bf16.mxu0 0
    %654 = vmatpush1.bf16.msra.mxu0 0
    %655 = vmatprep.subr.bf16.mxu0 0
    %656 = vmatpush1.bf16.msra.mxu0 0
    %657 = vmatprep.subr.bf16.mxu0 0
    %658 = vmatpush1.bf16.msra.mxu0 0
    %659 = vmatprep.subr.bf16.mxu0 0
    %660 = vmatpush1.bf16.msra.mxu0 0
    %661 = vmatprep.subr.bf16.mxu0 0
    %662 = vmatpush1.bf16.msra.mxu0 0
    %663 = vmatprep.subr.bf16.mxu0 0
    %664 = vmatpush1.bf16.msra.mxu0 0
    %665 = vmatprep.subr.bf16.mxu0 0
    %666 = vmatpush1.bf16.msra.mxu0 0
    %667 = vmatprep.subr.bf16.mxu0 0
    %668 = vmatpush1.bf16.msra.mxu0 0
    %669 = vmatprep.mubr.bf16.mxu0 0
    %670 = vmatmul.mubr.bf16.gmra.mrb[0].mxu0 %v164
    %v671 = vpop.f32.mrb[0].mxu0
    %v672 = vadd.f32 %v55, %v671
    %v673 = vpop.f32.mrb[0].mxu0
    %v674 = vadd.f32 %v55, %v673
    %v675 = vpop.f32.mrb[0].mxu0
    %v676 = vadd.f32 %v60, %v675
    %v677 = vpop.f32.mrb[0].mxu0
    %v678 = vadd.f32 %v60, %v677
    %679 = vmatprep.mubr.bf16.mxu0 0
    %680 = vmatmul.mubr.bf16.gmra.mrb[0].mxu0 %v167
    %v681 = vpop.f32.mrb[0].mxu0
    %v682 = vadd.f32 %v65, %v681
    %v683 = vpop.f32.mrb[0].mxu0
    %v684 = vadd.f32 %v65, %v683
    %v685 = vpop.f32.mrb[0].mxu0
    %v686 = vadd.f32 %v70, %v685
    %v687 = vpop.f32.mrb[0].mxu0
    %v688 = vadd.f32 %v70, %v687
    %689 = vdwg.mxu0
    %690 = vmatprep.subr.bf16.mxu0 %v222
    %691 = vmatpush1.bf16.msra.mxu0 %v219
    %692 = vmatprep.subr.bf16.mxu0 0
    %693 = vmatpush1.bf16.msra.mxu0 0
    %694 = vmatprep.subr.bf16.mxu0 0
    %695 = vmatpush1.bf16.msra.mxu0 0
    %696 = vmatprep.subr.bf16.mxu0 0
    %697 = vmatpush1.bf16.msra.mxu0 0
    %698 = vmatprep.subr.bf16.mxu0 0
    %699 = vmatpush1.bf16.msra.mxu0 0
    %700 = vmatprep.subr.bf16.mxu0 0
    %701 = vmatpush1.bf16.msra.mxu0 0
    %702 = vmatprep.subr.bf16.mxu0 0
    %703 = vmatpush1.bf16.msra.mxu0 0
    %704 = vmatprep.subr.bf16.mxu0 0
    %705 = vmatpush1.bf16.msra.mxu0 0
    %706 = vmatprep.subr.bf16.mxu0 0
    %707 = vmatpush1.bf16.msra.mxu0 0
    %708 = vmatprep.subr.bf16.mxu0 0
    %709 = vmatpush1.bf16.msra.mxu0 0
    %710 = vmatprep.subr.bf16.mxu0 0
    %711 = vmatpush1.bf16.msra.mxu0 0
    %712 = vmatprep.subr.bf16.mxu0 0
    %713 = vmatpush1.bf16.msra.mxu0 0
    %714 = vmatprep.subr.bf16.mxu0 0
    %715 = vmatpush1.bf16.msra.mxu0 0
    %716 = vmatprep.subr.bf16.mxu0 0
    %717 = vmatpush1.bf16.msra.mxu0 0
    %718 = vmatprep.subr.bf16.mxu0 0
    %719 = vmatpush1.bf16.msra.mxu0 0
    %720 = vmatprep.subr.bf16.mxu0 0
    %721 = vmatpush1.bf16.msra.mxu0 0
    %722 = vmatprep.mubr.bf16.mxu0 0
    %723 = vmatmul.mubr.bf16.gmra.mrb[0].mxu0 %v164
    %v724 = vpop.f32.mrb[0].mxu0
    %v725 = vadd.f32 %v55, %v724
    %v726 = vpop.f32.mrb[0].mxu0
    %v727 = vadd.f32 %v55, %v726
    %v728 = vpop.f32.mrb[0].mxu0
    %v729 = vadd.f32 %v60, %v728
    %v730 = vpop.f32.mrb[0].mxu0
    %v731 = vadd.f32 %v60, %v730
    %732 = vmatprep.mubr.bf16.mxu0 0
    %733 = vmatmul.mubr.bf16.gmra.mrb[0].mxu0 %v167
    %v734 = vpop.f32.mrb[0].mxu0
    %v735 = vadd.f32 %v65, %v734
    %v736 = vpop.f32.mrb[0].mxu0
    %v737 = vadd.f32 %v65, %v736
    %v738 = vpop.f32.mrb[0].mxu0
    %v739 = vadd.f32 %v70, %v738
    %v740 = vpop.f32.mrb[0].mxu0
    %v741 = vadd.f32 %v70, %v740
    %742 = vdwg.mxu0
    %743 = vmatprep.subr.bf16.mxu0 %v228
    %744 = vmatpush1.bf16.msra.mxu0 %v225
    %745 = vmatprep.subr.bf16.mxu0 0
    %746 = vmatpush1.bf16.msra.mxu0 0
    %747 = vmatprep.subr.bf16.mxu0 0
    %748 = vmatpush1.bf16.msra.mxu0 0
    %749 = vmatprep.subr.bf16.mxu0 0
    %750 = vmatpush1.bf16.msra.mxu0 0
    %751 = vmatprep.subr.bf16.mxu0 0
    %752 = vmatpush1.bf16.msra.mxu0 0
    %753 = vmatprep.subr.bf16.mxu0 0
    %754 = vmatpush1.bf16.msra.mxu0 0
    %755 = vmatprep.subr.bf16.mxu0 0
    %756 = vmatpush1.bf16.msra.mxu0 0
    %757 = vmatprep.subr.bf16.mxu0 0
    %758 = vmatpush1.bf16.msra.mxu0 0
    %759 = vmatprep.subr.bf16.mxu0 0
    %760 = vmatpush1.bf16.msra.mxu0 0
    %761 = vmatprep.subr.bf16.mxu0 0
    %762 = vmatpush1.bf16.msra.mxu0 0
    %763 = vmatprep.subr.bf16.mxu0 0
    %764 = vmatpush1.bf16.msra.mxu0 0
    %765 = vmatprep.subr.bf16.mxu0 0
    %766 = vmatpush1.bf16.msra.mxu0 0
    %767 = vmatprep.subr.bf16.mxu0 0
    %768 = vmatpush1.bf16.msra.mxu0 0
    %769 = vmatprep.subr.bf16.mxu0 0
    %770 = vmatpush1.bf16.msra.mxu0 0
    %771 = vmatprep.subr.bf16.mxu0 0
    %772 = vmatpush1.bf16.msra.mxu0 0
    %773 = vmatprep.subr.bf16.mxu0 0
    %774 = vmatpush1.bf16.msra.mxu0 0
    %775 = vmatprep.mubr.bf16.mxu0 0
    %776 = vmatmul.mubr.bf16.gmra.mrb[0].mxu0 %v164
    %v777 = vpop.f32.mrb[0].mxu0
    %v778 = vadd.f32 %v55, %v777
    %v779 = vpop.f32.mrb[0].mxu0
    %v780 = vadd.f32 %v55, %v779
    %v781 = vpop.f32.mrb[0].mxu0
    %v782 = vadd.f32 %v60, %v781
    %v783 = vpop.f32.mrb[0].mxu0
    %v784 = vadd.f32 %v60, %v783
    %785 = vmatprep.mubr.bf16.mxu0 0
    %786 = vmatmul.mubr.bf16.gmra.mrb[0].mxu0 %v167
    %v787 = vpop.f32.mrb[0].mxu0
    %v788 = vadd.f32 %v65, %v787
    %v789 = vpop.f32.mrb[0].mxu0
    %v790 = vadd.f32 %v65, %v789
    %v791 = vpop.f32.mrb[0].mxu0
    %v792 = vadd.f32 %v70, %v791
    %v793 = vpop.f32.mrb[0].mxu0
    %v794 = vadd.f32 %v70, %v793
    %795 = vdwg.mxu0
    %796 = vmatprep.subr.bf16.mxu0 %v234
    %797 = vmatpush1.bf16.msra.mxu0 %v231
    %798 = vmatprep.subr.bf16.mxu0 0
    %799 = vmatpush1.bf16.msra.mxu0 0
    %800 = vmatprep.subr.bf16.mxu0 0
    %801 = vmatpush1.bf16.msra.mxu0 0
    %802 = vmatprep.subr.bf16.mxu0 0
    %803 = vmatpush1.bf16.msra.mxu0 0
    %804 = vmatprep.subr.bf16.mxu0 0
    %805 = vmatpush1.bf16.msra.mxu0 0
    %806 = vmatprep.subr.bf16.mxu0 0
    %807 = vmatpush1.bf16.msra.mxu0 0
    %808 = vmatprep.subr.bf16.mxu0 0
    %809 = vmatpush1.bf16.msra.mxu0 0
    %810 = vmatprep.subr.bf16.mxu0 0
    %811 = vmatpush1.bf16.msra.mxu0 0
    %812 = vmatprep.subr.bf16.mxu0 0
    %813 = vmatpush1.bf16.msra.mxu0 0
    %814 = vmatprep.subr.bf16.mxu0 0
    %815 = vmatpush1.bf16.msra.mxu0 0
    %816 = vmatprep.subr.bf16.mxu0 0
    %817 = vmatpush1.bf16.msra.mxu0 0
    %818 = vmatprep.subr.bf16.mxu0 0
    %819 = vmatpush1.bf16.msra.mxu0 0
    %820 = vmatprep.subr.bf16.mxu0 0
    %821 = vmatpush1.bf16.msra.mxu0 0
    %822 = vmatprep.subr.bf16.mxu0 0
    %823 = vmatpush1.bf16.msra.mxu0 0
    %824 = vmatprep.subr.bf16.mxu0 0
    %825 = vmatpush1.bf16.msra.mxu0 0
    %826 = vmatprep.subr.bf16.mxu0 0
    %827 = vmatpush1.bf16.msra.mxu0 0
    %828 = vmatprep.mubr.bf16.mxu0 0
    %829 = vmatmul.mubr.bf16.gmra.mrb[0].mxu0 %v164
    %v830 = vpop.f32.mrb[0].mxu0
    %v831 = vadd.f32 %v55, %v830
    %v832 = vpop.f32.mrb[0].mxu0
    %v833 = vadd.f32 %v55, %v832
    %v834 = vpop.f32.mrb[0].mxu0
    %v835 = vadd.f32 %v60, %v834
    %v836 = vpop.f32.mrb[0].mxu0
    %v837 = vadd.f32 %v60, %v836
    %838 = vmatprep.mubr.bf16.mxu0 0
    %839 = vmatmul.mubr.bf16.gmra.mrb[0].mxu0 %v167
    %v840 = vpop.f32.mrb[0].mxu0
    %v841 = vadd.f32 %v65, %v840
    %v842 = vpop.f32.mrb[0].mxu0
    %v843 = vadd.f32 %v65, %v842
    %v844 = vpop.f32.mrb[0].mxu0
    %v845 = vadd.f32 %v70, %v844
    %v846 = vpop.f32.mrb[0].mxu0
    %v847 = vadd.f32 %v70, %v846
    %848 = vdwg.mxu0
    %849 = vmatprep.subr.bf16.mxu0 %v240
    %850 = vmatpush1.bf16.msra.mxu0 %v237
    %851 = vmatprep.subr.bf16.mxu0 0
    %852 = vmatpush1.bf16.msra.mxu0 0
    %853 = vmatprep.subr.bf16.mxu0 0
    %854 = vmatpush1.bf16.msra.mxu0 0
    %855 = vmatprep.subr.bf16.mxu0 0
    %856 = vmatpush1.bf16.msra.mxu0 0
    %857 = vmatprep.subr.bf16.mxu0 0
    %858 = vmatpush1.bf16.msra.mxu0 0
    %859 = vmatprep.subr.bf16.mxu0 0
    %860 = vmatpush1.bf16.msra.mxu0 0
    %861 = vmatprep.subr.bf16.mxu0 0
    %862 = vmatpush1.bf16.msra.mxu0 0
    %863 = vmatprep.subr.bf16.mxu0 0
    %864 = vmatpush1.bf16.msra.mxu0 0
    %865 = vmatprep.subr.bf16.mxu0 0
    %866 = vmatpush1.bf16.msra.mxu0 0
    %867 = vmatprep.subr.bf16.mxu0 0
    %868 = vmatpush1.bf16.msra.mxu0 0
    %869 = vmatprep.subr.bf16.mxu0 0
    %870 = vmatpush1.bf16.msra.mxu0 0
    %871 = vmatprep.subr.bf16.mxu0 0
    %872 = vmatpush1.bf16.msra.mxu0 0
    %873 = vmatprep.subr.bf16.mxu0 0
    %874 = vmatpush1.bf16.msra.mxu0 0
    %875 = vmatprep.subr.bf16.mxu0 0
    %876 = vmatpush1.bf16.msra.mxu0 0
    %877 = vmatprep.subr.bf16.mxu0 0
    %878 = vmatpush1.bf16.msra.mxu0 0
    %879 = vmatprep.subr.bf16.mxu0 0
    %880 = vmatpush1.bf16.msra.mxu0 0
    %881 = vmatprep.mubr.bf16.mxu0 0
    %882 = vmatmul.mubr.bf16.gmra.mrb[0].mxu0 %v164
    %v883 = vpop.f32.mrb[0].mxu0
    %v884 = vadd.f32 %v55, %v883
    %v885 = vpop.f32.mrb[0].mxu0
    %v886 = vadd.f32 %v55, %v885
    %v887 = vpop.f32.mrb[0].mxu0
    %v888 = vadd.f32 %v60, %v887
    %v889 = vpop.f32.mrb[0].mxu0
    %v890 = vadd.f32 %v60, %v889
    %891 = vmatprep.mubr.bf16.mxu0 0
    %892 = vmatmul.mubr.bf16.gmra.mrb[0].mxu0 %v167
    %v893 = vpop.f32.mrb[0].mxu0
    %v894 = vadd.f32 %v65, %v893
    %v895 = vpop.f32.mrb[0].mxu0
    %v896 = vadd.f32 %v65, %v895
    %v897 = vpop.f32.mrb[0].mxu0
    %v898 = vadd.f32 %v70, %v897
    %v899 = vpop.f32.mrb[0].mxu0
    %v900 = vadd.f32 %v70, %v899
    %901 = vdwg.mxu0
    %902 = vmatprep.subr.bf16.mxu0 %v246
    %903 = vmatpush1.bf16.msra.mxu0 %v243
    %904 = vmatprep.subr.bf16.mxu0 0
    %905 = vmatpush1.bf16.msra.mxu0 0
    %906 = vmatprep.subr.bf16.mxu0 0
    %907 = vmatpush1.bf16.msra.mxu0 0
    %908 = vmatprep.subr.bf16.mxu0 0
    %909 = vmatpush1.bf16.msra.mxu0 0
    %910 = vmatprep.subr.bf16.mxu0 0
    %911 = vmatpush1.bf16.msra.mxu0 0
    %912 = vmatprep.subr.bf16.mxu0 0
    %913 = vmatpush1.bf16.msra.mxu0 0
    %914 = vmatprep.subr.bf16.mxu0 0
    %915 = vmatpush1.bf16.msra.mxu0 0
    %916 = vmatprep.subr.bf16.mxu0 0
    %917 = vmatpush1.bf16.msra.mxu0 0
    %918 = vmatprep.subr.bf16.mxu0 0
    %919 = vmatpush1.bf16.msra.mxu0 0
    %920 = vmatprep.subr.bf16.mxu0 0
    %921 = vmatpush1.bf16.msra.mxu0 0
    %922 = vmatprep.subr.bf16.mxu0 0
    %923 = vmatpush1.bf16.msra.mxu0 0
    %924 = vmatprep.subr.bf16.mxu0 0
    %925 = vmatpush1.bf16.msra.mxu0 0
    %926 = vmatprep.subr.bf16.mxu0 0
    %927 = vmatpush1.bf16.msra.mxu0 0
    %928 = vmatprep.subr.bf16.mxu0 0
    %929 = vmatpush1.bf16.msra.mxu0 0
    %930 = vmatprep.subr.bf16.mxu0 0
    %931 = vmatpush1.bf16.msra.mxu0 0
    %932 = vmatprep.subr.bf16.mxu0 0
    %933 = vmatpush1.bf16.msra.mxu0 0
    %934 = vmatprep.mubr.bf16.mxu0 0
    %935 = vmatmul.mubr.bf16.gmra.mrb[0].mxu0 %v164
    %v936 = vpop.f32.mrb[0].mxu0
    %v937 = vadd.f32 %v55, %v936
    %v938 = vpop.f32.mrb[0].mxu0
    %v939 = vadd.f32 %v55, %v938
    %v940 = vpop.f32.mrb[0].mxu0
    %v941 = vadd.f32 %v60, %v940
    %v942 = vpop.f32.mrb[0].mxu0
    %v943 = vadd.f32 %v60, %v942
    %944 = vmatprep.mubr.bf16.mxu0 0
    %945 = vmatmul.mubr.bf16.gmra.mrb[0].mxu0 %v167
    %v946 = vpop.f32.mrb[0].mxu0
    %v947 = vadd.f32 %v65, %v946
    %v948 = vpop.f32.mrb[0].mxu0
    %v949 = vadd.f32 %v65, %v948
    %v950 = vpop.f32.mrb[0].mxu0
    %v951 = vadd.f32 %v70, %v950
    %v952 = vpop.f32.mrb[0].mxu0
    %v953 = vadd.f32 %v70, %v952
    %954 = vdwg.mxu0
    %955 = vmatprep.subr.bf16.mxu0 %v252
    %956 = vmatpush1.bf16.msra.mxu0 %v249
    %957 = vmatprep.subr.bf16.mxu0 0
    %958 = vmatpush1.bf16.msra.mxu0 0
    %959 = vmatprep.subr.bf16.mxu0 0
    %960 = vmatpush1.bf16.msra.mxu0 0
    %961 = vmatprep.subr.bf16.mxu0 0
    %962 = vmatpush1.bf16.msra.mxu0 0
    %963 = vmatprep.subr.bf16.mxu0 0
    %964 = vmatpush1.bf16.msra.mxu0 0
    %965 = vmatprep.subr.bf16.mxu0 0
    %966 = vmatpush1.bf16.msra.mxu0 0
    %967 = vmatprep.subr.bf16.mxu0 0
    %968 = vmatpush1.bf16.msra.mxu0 0
    %969 = vmatprep.subr.bf16.mxu0 0
    %970 = vmatpush1.bf16.msra.mxu0 0
    %971 = vmatprep.subr.bf16.mxu0 0
    %972 = vmatpush1.bf16.msra.mxu0 0
    %973 = vmatprep.subr.bf16.mxu0 0
    %974 = vmatpush1.bf16.msra.mxu0 0
    %975 = vmatprep.subr.bf16.mxu0 0
    %976 = vmatpush1.bf16.msra.mxu0 0
    %977 = vmatprep.subr.bf16.mxu0 0
    %978 = vmatpush1.bf16.msra.mxu0 0
    %979 = vmatprep.subr.bf16.mxu0 0
    %980 = vmatpush1.bf16.msra.mxu0 0
    %981 = vmatprep.subr.bf16.mxu0 0
    %982 = vmatpush1.bf16.msra.mxu0 0
    %983 = vmatprep.subr.bf16.mxu0 0
    %984 = vmatpush1.bf16.msra.mxu0 0
    %985 = vmatprep.subr.bf16.mxu0 0
    %986 = vmatpush1.bf16.msra.mxu0 0
    %987 = vmatprep.mubr.bf16.mxu0 0
    %988 = vmatmul.mubr.bf16.gmra.mrb[0].mxu0 %v164
    %v989 = vpop.f32.mrb[0].mxu0
    %v990 = vadd.f32 %v55, %v989
    %v991 = vpop.f32.mrb[0].mxu0
    %v992 = vadd.f32 %v55, %v991
    %v993 = vpop.f32.mrb[0].mxu0
    %v994 = vadd.f32 %v60, %v993
    %v995 = vpop.f32.mrb[0].mxu0
    %v996 = vadd.f32 %v60, %v995
    %997 = vmatprep.mubr.bf16.mxu0 0
    %998 = vmatmul.mubr.bf16.gmra.mrb[0].mxu0 %v167
    %v999 = vpop.f32.mrb[0].mxu0
    %v1000 = vadd.f32 %v65, %v999
    %v1001 = vpop.f32.mrb[0].mxu0
    %v1002 = vadd.f32 %v65, %v1001
    %v1003 = vpop.f32.mrb[0].mxu0
    %v1004 = vadd.f32 %v70, %v1003
    %v1005 = vpop.f32.mrb[0].mxu0
    %v1006 = vadd.f32 %v70, %v1005
    %1007 = vdwg.mxu0
    %1008 = vmatprep.subr.bf16.mxu0 %v258
    %1009 = vmatpush1.bf16.msra.mxu0 %v255
    %1010 = vmatprep.subr.bf16.mxu0 0
    %1011 = vmatpush1.bf16.msra.mxu0 0
    %1012 = vmatprep.subr.bf16.mxu0 0
    %1013 = vmatpush1.bf16.msra.mxu0 0
    %1014 = vmatprep.subr.bf16.mxu0 0
    %1015 = vmatpush1.bf16.msra.mxu0 0
    %1016 = vmatprep.subr.bf16.mxu0 0
    %1017 = vmatpush1.bf16.msra.mxu0 0
    %1018 = vmatprep.subr.bf16.mxu0 0
    %1019 = vmatpush1.bf16.msra.mxu0 0
    %1020 = vmatprep.subr.bf16.mxu0 0
    %1021 = vmatpush1.bf16.msra.mxu0 0
    %1022 = vmatprep.subr.bf16.mxu0 0
    %1023 = vmatpush1.bf16.msra.mxu0 0
    %1024 = vmatprep.subr.bf16.mxu0 0
    %1025 = vmatpush1.bf16.msra.mxu0 0
    %1026 = vmatprep.subr.bf16.mxu0 0
    %1027 = vmatpush1.bf16.msra.mxu0 0
    %1028 = vmatprep.subr.bf16.mxu0 0
    %1029 = vmatpush1.bf16.msra.mxu0 0
    %1030 = vmatprep.subr.bf16.mxu0 0
    %1031 = vmatpush1.bf16.msra.mxu0 0
    %1032 = vmatprep.subr.bf16.mxu0 0
    %1033 = vmatpush1.bf16.msra.mxu0 0
    %1034 = vmatprep.subr.bf16.mxu0 0
    %1035 = vmatpush1.bf16.msra.mxu0 0
    %1036 = vmatprep.subr.bf16.mxu0 0
    %1037 = vmatpush1.bf16.msra.mxu0 0
    %1038 = vmatprep.subr.bf16.mxu0 0
    %1039 = vmatpush1.bf16.msra.mxu0 0
    %1040 = vmatprep.mubr.bf16.mxu0 0
    %1041 = vmatmul.mubr.bf16.gmra.mrb[0].mxu0 %v164
    %v1042 = vpop.f32.mrb[0].mxu0
    %v1043 = vadd.f32 %v55, %v1042
    %v1044 = vpop.f32.mrb[0].mxu0
    %v1045 = vadd.f32 %v55, %v1044
    %v1046 = vpop.f32.mrb[0].mxu0
    %v1047 = vadd.f32 %v60, %v1046
    %v1048 = vpop.f32.mrb[0].mxu0
    %v1049 = vadd.f32 %v60, %v1048
    %1050 = vmatprep.mubr.bf16.mxu0 0
    %1051 = vmatmul.mubr.bf16.gmra.mrb[0].mxu0 %v167
    %v1052 = vpop.f32.mrb[0].mxu0
    %v1053 = vadd.f32 %v65, %v1052
    %v1054 = vpop.f32.mrb[0].mxu0
    %v1055 = vadd.f32 %v65, %v1054
    %v1056 = vpop.f32.mrb[0].mxu0
    %v1057 = vadd.f32 %v70, %v1056
    %v1058 = vpop.f32.mrb[0].mxu0
    %v1059 = vadd.f32 %v70, %v1058
    %1060 = vdwg.mxu0
    %1061 = vmatprep.subr.bf16.mxu0 %v264
    %1062 = vmatpush1.bf16.msra.mxu0 %v261
    %1063 = vmatprep.subr.bf16.mxu0 0
    %1064 = vmatpush1.bf16.msra.mxu0 0
    %1065 = vmatprep.subr.bf16.mxu0 0
    %1066 = vmatpush1.bf16.msra.mxu0 0
    %1067 = vmatprep.subr.bf16.mxu0 0
    %1068 = vmatpush1.bf16.msra.mxu0 0
    %1069 = vmatprep.subr.bf16.mxu0 0
    %1070 = vmatpush1.bf16.msra.mxu0 0
    %1071 = vmatprep.subr.bf16.mxu0 0
    %1072 = vmatpush1.bf16.msra.mxu0 0
    %1073 = vmatprep.subr.bf16.mxu0 0
    %1074 = vmatpush1.bf16.msra.mxu0 0
    %1075 = vmatprep.subr.bf16.mxu0 0
    %1076 = vmatpush1.bf16.msra.mxu0 0
    %1077 = vmatprep.subr.bf16.mxu0 0
    %1078 = vmatpush1.bf16.msra.mxu0 0
    %1079 = vmatprep.subr.bf16.mxu0 0
    %1080 = vmatpush1.bf16.msra.mxu0 0
    %1081 = vmatprep.subr.bf16.mxu0 0
    %1082 = vmatpush1.bf16.msra.mxu0 0
    %1083 = vmatprep.subr.bf16.mxu0 0
    %1084 = vmatpush1.bf16.msra.mxu0 0
    %1085 = vmatprep.subr.bf16.mxu0 0
    %1086 = vmatpush1.bf16.msra.mxu0 0
    %1087 = vmatprep.subr.bf16.mxu0 0
    %1088 = vmatpush1.bf16.msra.mxu0 0
    %1089 = vmatprep.subr.bf16.mxu0 0
    %1090 = vmatpush1.bf16.msra.mxu0 0
    %1091 = vmatprep.subr.bf16.mxu0 0
    %1092 = vmatpush1.bf16.msra.mxu0 0
    %1093 = vmatprep.mubr.bf16.mxu0 0
    %1094 = vmatmul.mubr.bf16.gmra.mrb[0].mxu0 %v164
    %v1095 = vpop.f32.mrb[0].mxu0
    %v1096 = vadd.f32 %v55, %v1095
    %v1097 = vpop.f32.mrb[0].mxu0
    %v1098 = vadd.f32 %v55, %v1097
    %v1099 = vpop.f32.mrb[0].mxu0
    %v1100 = vadd.f32 %v60, %v1099
    %v1101 = vpop.f32.mrb[0].mxu0
    %v1102 = vadd.f32 %v60, %v1101
    %1103 = vmatprep.mubr.bf16.mxu0 0
    %1104 = vmatmul.mubr.bf16.gmra.mrb[0].mxu0 %v167
    %v1105 = vpop.f32.mrb[0].mxu0
    %v1106 = vadd.f32 %v65, %v1105
    %v1107 = vpop.f32.mrb[0].mxu0
    %v1108 = vadd.f32 %v65, %v1107
    %v1109 = vpop.f32.mrb[0].mxu0
    %v1110 = vadd.f32 %v70, %v1109
    %v1111 = vpop.f32.mrb[0].mxu0
    %v1112 = vadd.f32 %v70, %v1111
    %1113 = vdwg.mxu0
    %v1114 = vmax.f32 %v301, 0.0
    %v1115 = vmax.f32 %v303, 0.0
    %v1116 = vmax.f32 %v354, 0.0
    %v1117 = vmax.f32 %v356, 0.0
    %v1118 = vmax.f32 %v407, 0.0
    %v1119 = vmax.f32 %v409, 0.0
    %v1120 = vmax.f32 %v460, 0.0
    %v1121 = vmax.f32 %v462, 0.0
    %v1122 = vmax.f32 %v513, 0.0
    %v1123 = vmax.f32 %v515, 0.0
    %v1124 = vmax.f32 %v566, 0.0
    %v1125 = vmax.f32 %v568, 0.0
    %v1126 = vmax.f32 %v619, 0.0
    %v1127 = vmax.f32 %v621, 0.0
    %v1128 = vmax.f32 %v672, 0.0
    %v1129 = vmax.f32 %v674, 0.0
    %v1130 = vmax.f32 %v725, 0.0
    %v1131 = vmax.f32 %v727, 0.0
    %v1132 = vmax.f32 %v778, 0.0
    %v1133 = vmax.f32 %v780, 0.0
    %v1134 = vmax.f32 %v831, 0.0
    %v1135 = vmax.f32 %v833, 0.0
    %v1136 = vmax.f32 %v884, 0.0
    %v1137 = vmax.f32 %v886, 0.0
    %v1138 = vmax.f32 %v937, 0.0
    %v1139 = vmax.f32 %v939, 0.0
    %v1140 = vmax.f32 %v990, 0.0
    %v1141 = vmax.f32 %v992, 0.0
    %v1142 = vmax.f32 %v1043, 0.0
    %v1143 = vmax.f32 %v1045, 0.0
    %v1144 = vmax.f32 %v1096, 0.0
    %v1145 = vmax.f32 %v1098, 0.0
    %v1146 = vmax.f32 %v305, 0.0
    %v1147 = vmax.f32 %v307, 0.0
    %v1148 = vmax.f32 %v358, 0.0
    %v1149 = vmax.f32 %v360, 0.0
    %v1150 = vmax.f32 %v411, 0.0
    %v1151 = vmax.f32 %v413, 0.0
    %v1152 = vmax.f32 %v464, 0.0
    %v1153 = vmax.f32 %v466, 0.0
    %v1154 = vmax.f32 %v517, 0.0
    %v1155 = vmax.f32 %v519, 0.0
    %v1156 = vmax.f32 %v570, 0.0
    %v1157 = vmax.f32 %v572, 0.0
    %v1158 = vmax.f32 %v623, 0.0
    %v1159 = vmax.f32 %v625, 0.0
    %v1160 = vmax.f32 %v676, 0.0
    %v1161 = vmax.f32 %v678, 0.0
    %v1162 = vmax.f32 %v729, 0.0
    %v1163 = vmax.f32 %v731, 0.0
    %v1164 = vmax.f32 %v782, 0.0
    %v1165 = vmax.f32 %v784, 0.0
    %v1166 = vmax.f32 %v835, 0.0
    %v1167 = vmax.f32 %v837, 0.0
    %v1168 = vmax.f32 %v888, 0.0
    %v1169 = vmax.f32 %v890, 0.0
    %v1170 = vmax.f32 %v941, 0.0
    %v1171 = vmax.f32 %v943, 0.0
    %v1172 = vmax.f32 %v994, 0.0
    %v1173 = vmax.f32 %v996, 0.0
    %v1174 = vmax.f32 %v1047, 0.0
    %v1175 = vmax.f32 %v1049, 0.0
    %v1176 = vmax.f32 %v1100, 0.0
    %v1177 = vmax.f32 %v1102, 0.0
    %v1178 = vmax.f32 %v311, 0.0
    %v1179 = vmax.f32 %v313, 0.0
    %v1180 = vmax.f32 %v364, 0.0
    %v1181 = vmax.f32 %v366, 0.0
    %v1182 = vmax.f32 %v417, 0.0
    %v1183 = vmax.f32 %v419, 0.0
    %v1184 = vmax.f32 %v470, 0.0
    %v1185 = vmax.f32 %v472, 0.0
    %v1186 = vmax.f32 %v523, 0.0
    %v1187 = vmax.f32 %v525, 0.0
    %v1188 = vmax.f32 %v576, 0.0
    %v1189 = vmax.f32 %v578, 0.0
    %v1190 = vmax.f32 %v629, 0.0
    %v1191 = vmax.f32 %v631, 0.0
    %v1192 = vmax.f32 %v682, 0.0
    %v1193 = vmax.f32 %v684, 0.0
    %v1194 = vmax.f32 %v735, 0.0
    %v1195 = vmax.f32 %v737, 0.0
    %v1196 = vmax.f32 %v788, 0.0
    %v1197 = vmax.f32 %v790, 0.0
    %v1198 = vmax.f32 %v841, 0.0
    %v1199 = vmax.f32 %v843, 0.0
    %v1200 = vmax.f32 %v894, 0.0
    %v1201 = vmax.f32 %v896, 0.0
    %v1202 = vmax.f32 %v947, 0.0
    %v1203 = vmax.f32 %v949, 0.0
    %v1204 = vmax.f32 %v1000, 0.0
    %v1205 = vmax.f32 %v1002, 0.0
    %v1206 = vmax.f32 %v1053, 0.0
    %v1207 = vmax.f32 %v1055, 0.0
    %v1208 = vmax.f32 %v1106, 0.0
    %v1209 = vmax.f32 %v1108, 0.0
    %v1210 = vmax.f32 %v315, 0.0
    %v1211 = vmax.f32 %v317, 0.0
    %v1212 = vmax.f32 %v368, 0.0
    %v1213 = vmax.f32 %v370, 0.0
    %v1214 = vmax.f32 %v421, 0.0
    %v1215 = vmax.f32 %v423, 0.0
    %v1216 = vmax.f32 %v474, 0.0
    %v1217 = vmax.f32 %v476, 0.0
    %v1218 = vmax.f32 %v527, 0.0
    %v1219 = vmax.f32 %v529, 0.0
    %v1220 = vmax.f32 %v580, 0.0
    %v1221 = vmax.f32 %v582, 0.0
    %v1222 = vmax.f32 %v633, 0.0
    %v1223 = vmax.f32 %v635, 0.0
    %v1224 = vmax.f32 %v686, 0.0
    %v1225 = vmax.f32 %v688, 0.0
    %v1226 = vmax.f32 %v739, 0.0
    %v1227 = vmax.f32 %v741, 0.0
    %v1228 = vmax.f32 %v792, 0.0
    %v1229 = vmax.f32 %v794, 0.0
    %v1230 = vmax.f32 %v845, 0.0
    %v1231 = vmax.f32 %v847, 0.0
    %v1232 = vmax.f32 %v898, 0.0
    %v1233 = vmax.f32 %v900, 0.0
    %v1234 = vmax.f32 %v951, 0.0
    %v1235 = vmax.f32 %v953, 0.0
    %v1236 = vmax.f32 %v1004, 0.0
    %v1237 = vmax.f32 %v1006, 0.0
    %v1238 = vmax.f32 %v1057, 0.0
    %v1239 = vmax.f32 %v1059, 0.0
    %v1240 = vmax.f32 %v1110, 0.0
    %v1241 = vmax.f32 %v1112, 0.0
    %v1242 = vpack.c.bf16 %v1146, %v1114
    %v1243 = vpack.c.bf16 %v1147, %v1115
    %v1244 = vpack.c.bf16 %v1148, %v1116
    %v1245 = vpack.c.bf16 %v1149, %v1117
    %v1246 = vpack.c.bf16 %v1150, %v1118
    %v1247 = vpack.c.bf16 %v1151, %v1119
    %v1248 = vpack.c.bf16 %v1152, %v1120
    %v1249 = vpack.c.bf16 %v1153, %v1121
    %v1250 = vpack.c.bf16 %v1154, %v1122
    %v1251 = vpack.c.bf16 %v1155, %v1123
    %v1252 = vpack.c.bf16 %v1156, %v1124
    %v1253 = vpack.c.bf16 %v1157, %v1125
    %v1254 = vpack.c.bf16 %v1158, %v1126
    %v1255 = vpack.c.bf16 %v1159, %v1127
    %v1256 = vpack.c.bf16 %v1160, %v1128
    %v1257 = vpack.c.bf16 %v1161, %v1129
    %v1258 = vpack.c.bf16 %v1162, %v1130
    %v1259 = vpack.c.bf16 %v1163, %v1131
    %v1260 = vpack.c.bf16 %v1164, %v1132
    %v1261 = vpack.c.bf16 %v1165, %v1133
    %v1262 = vpack.c.bf16 %v1166, %v1134
    %v1263 = vpack.c.bf16 %v1167, %v1135
    %v1264 = vpack.c.bf16 %v1168, %v1136
    %v1265 = vpack.c.bf16 %v1169, %v1137
    %v1266 = vpack.c.bf16 %v1170, %v1138
    %v1267 = vpack.c.bf16 %v1171, %v1139
    %v1268 = vpack.c.bf16 %v1172, %v1140
    %v1269 = vpack.c.bf16 %v1173, %v1141
    %v1270 = vpack.c.bf16 %v1174, %v1142
    %v1271 = vpack.c.bf16 %v1175, %v1143
    %v1272 = vpack.c.bf16 %v1176, %v1144
    %v1273 = vpack.c.bf16 %v1177, %v1145
    %v1274 = vpack.c.bf16 %v1210, %v1178
    %v1275 = vpack.c.bf16 %v1211, %v1179
    %v1276 = vpack.c.bf16 %v1212, %v1180
    %v1277 = vpack.c.bf16 %v1213, %v1181
    %v1278 = vpack.c.bf16 %v1214, %v1182
    %v1279 = vpack.c.bf16 %v1215, %v1183
    %v1280 = vpack.c.bf16 %v1216, %v1184
    %v1281 = vpack.c.bf16 %v1217, %v1185
    %v1282 = vpack.c.bf16 %v1218, %v1186
    %v1283 = vpack.c.bf16 %v1219, %v1187
    %v1284 = vpack.c.bf16 %v1220, %v1188
    %v1285 = vpack.c.bf16 %v1221, %v1189
    %v1286 = vpack.c.bf16 %v1222, %v1190
    %v1287 = vpack.c.bf16 %v1223, %v1191
    %v1288 = vpack.c.bf16 %v1224, %v1192
    %v1289 = vpack.c.bf16 %v1225, %v1193
    %v1290 = vpack.c.bf16 %v1226, %v1194
    %v1291 = vpack.c.bf16 %v1227, %v1195
    %v1292 = vpack.c.bf16 %v1228, %v1196
    %v1293 = vpack.c.bf16 %v1229, %v1197
    %v1294 = vpack.c.bf16 %v1230, %v1198
    %v1295 = vpack.c.bf16 %v1231, %v1199
    %v1296 = vpack.c.bf16 %v1232, %v1200
    %v1297 = vpack.c.bf16 %v1233, %v1201
    %v1298 = vpack.c.bf16 %v1234, %v1202
    %v1299 = vpack.c.bf16 %v1235, %v1203
    %v1300 = vpack.c.bf16 %v1236, %v1204
    %v1301 = vpack.c.bf16 %v1237, %v1205
    %v1302 = vpack.c.bf16 %v1238, %v1206
    %v1303 = vpack.c.bf16 %v1239, %v1207
    %v1304 = vpack.c.bf16 %v1240, %v1208
    %v1305 = vpack.c.bf16 %v1241, %v1209
    %v1306 = vld [vmem:[%s3] sm:$0xf]
    %v1307 = vld [vmem:[%s3 + $0x4] sm:$0xf]
    %v1308 = vld [vmem:[%s3 + $0x8] sm:$0xf]
    %v1309 = vld [vmem:[%s3 + $0xc] sm:$0xf]
    %v1310 = vld [vmem:[%s4] sm:$0xff]
    %v1311 = vld [vmem:[%s4 + $0x8] sm:$0xff]
    %v1312 = vld [vmem:[%s4 + $0x10] sm:$0xff]
    %v1313 = vld [vmem:[%s4 + $0x18] sm:$0xff]
    %1315 = vset.pattern.permute.xlu0 0
    %1316 = vperm.xlu0 %1315, %v1310
    %v1317 = vpop.permute.xlu0 %1316
    %1320 = vset.pattern.permute.xlu0 0
    %1321 = vperm.xlu0 %1320, %v1311
    %v1322 = vpop.permute.xlu0 %1321
    %1325 = vset.pattern.permute.xlu0 0
    %1326 = vperm.xlu0 %1325, %v1312
    %v1327 = vpop.permute.xlu0 %1326
    %1330 = vset.pattern.permute.xlu0 0
    %1331 = vperm.xlu0 %1330, %v1313
    %v1332 = vpop.permute.xlu0 %1331
    %v1338 = vunpack.c.l.b16 %v1306
    %v1339 = vunpack.c.l.b16 %v1307
    %v1340 = vunpack.c.l.b16 %v1308
    %v1341 = vunpack.c.l.b16 %v1309
    %v1342 = vpack.c.b16 %v1339, %v1338
    %v1343 = vpack.c.b16 %v1341, %v1340
    %vm1344 = vcmask 261120
    %v1346 = vsel %vm1344, %v1342, 0
    %v1349 = vsel %vm1344, %v1343, 0
    %1351 = vmatprep.subr.bf16.mxu0 %v1243
    %1352 = vmatpush1.bf16.msra.mxu0 %v1242
    %1353 = vmatprep.subr.bf16.mxu0 %v1275
    %1354 = vmatpush1.bf16.msra.mxu0 %v1274
    %1355 = vmatprep.subr.bf16.mxu0 0
    %1356 = vmatpush1.bf16.msra.mxu0 0
    %1357 = vmatprep.subr.bf16.mxu0 0
    %1358 = vmatpush1.bf16.msra.mxu0 0
    %1359 = vmatprep.subr.bf16.mxu0 0
    %1360 = vmatpush1.bf16.msra.mxu0 0
    %1361 = vmatprep.subr.bf16.mxu0 0
    %1362 = vmatpush1.bf16.msra.mxu0 0
    %1363 = vmatprep.subr.bf16.mxu0 0
    %1364 = vmatpush1.bf16.msra.mxu0 0
    %1365 = vmatprep.subr.bf16.mxu0 0
    %1366 = vmatpush1.bf16.msra.mxu0 0
    %1367 = vmatprep.subr.bf16.mxu0 0
    %1368 = vmatpush1.bf16.msra.mxu0 0
    %1369 = vmatprep.subr.bf16.mxu0 0
    %1370 = vmatpush1.bf16.msra.mxu0 0
    %1371 = vmatprep.subr.bf16.mxu0 0
    %1372 = vmatpush1.bf16.msra.mxu0 0
    %1373 = vmatprep.subr.bf16.mxu0 0
    %1374 = vmatpush1.bf16.msra.mxu0 0
    %1375 = vmatprep.subr.bf16.mxu0 0
    %1376 = vmatpush1.bf16.msra.mxu0 0
    %1377 = vmatprep.subr.bf16.mxu0 0
    %1378 = vmatpush1.bf16.msra.mxu0 0
    %1379 = vmatprep.subr.bf16.mxu0 0
    %1380 = vmatpush1.bf16.msra.mxu0 0
    %1381 = vmatprep.subr.bf16.mxu0 0
    %1382 = vmatpush1.bf16.msra.mxu0 0
    %1383 = vmatprep.mubr.bf16.mxu0 0
    %1384 = vmatmul.mubr.bf16.gmra.mrb[0].mxu0 %v1346
    %v1385 = vpop.f32.mrb[0].mxu0
    %v1386 = vadd.f32 %v1317, %v1385
    %v1387 = vpop.f32.mrb[0].mxu0
    %v1388 = vadd.f32 %v1317, %v1387
    %v1389 = vpop.f32.mrb[0].mxu0
    %v1390 = vadd.f32 %v1322, %v1389
    %v1391 = vpop.f32.mrb[0].mxu0
    %v1392 = vadd.f32 %v1322, %v1391
    %1393 = vmatprep.mubr.bf16.mxu0 0
    %1394 = vmatmul.mubr.bf16.gmra.mrb[0].mxu0 %v1349
    %v1395 = vpop.f32.mrb[0].mxu0
    %v1396 = vadd.f32 %v1327, %v1395
    %v1397 = vpop.f32.mrb[0].mxu0
    %v1398 = vadd.f32 %v1327, %v1397
    %v1399 = vpop.f32.mrb[0].mxu0
    %v1400 = vadd.f32 %v1332, %v1399
    %v1401 = vpop.f32.mrb[0].mxu0
    %v1402 = vadd.f32 %v1332, %v1401
    %1403 = vdwg.mxu0
    %1404 = vmatprep.subr.bf16.mxu0 %v1245
    %1405 = vmatpush1.bf16.msra.mxu0 %v1244
    %1406 = vmatprep.subr.bf16.mxu0 %v1277
    %1407 = vmatpush1.bf16.msra.mxu0 %v1276
    %1408 = vmatprep.subr.bf16.mxu0 0
    %1409 = vmatpush1.bf16.msra.mxu0 0
    %1410 = vmatprep.subr.bf16.mxu0 0
    %1411 = vmatpush1.bf16.msra.mxu0 0
    %1412 = vmatprep.subr.bf16.mxu0 0
    %1413 = vmatpush1.bf16.msra.mxu0 0
    %1414 = vmatprep.subr.bf16.mxu0 0
    %1415 = vmatpush1.bf16.msra.mxu0 0
    %1416 = vmatprep.subr.bf16.mxu0 0
    %1417 = vmatpush1.bf16.msra.mxu0 0
    %1418 = vmatprep.subr.bf16.mxu0 0
    %1419 = vmatpush1.bf16.msra.mxu0 0
    %1420 = vmatprep.subr.bf16.mxu0 0
    %1421 = vmatpush1.bf16.msra.mxu0 0
    %1422 = vmatprep.subr.bf16.mxu0 0
    %1423 = vmatpush1.bf16.msra.mxu0 0
    %1424 = vmatprep.subr.bf16.mxu0 0
    %1425 = vmatpush1.bf16.msra.mxu0 0
    %1426 = vmatprep.subr.bf16.mxu0 0
    %1427 = vmatpush1.bf16.msra.mxu0 0
    %1428 = vmatprep.subr.bf16.mxu0 0
    %1429 = vmatpush1.bf16.msra.mxu0 0
    %1430 = vmatprep.subr.bf16.mxu0 0
    %1431 = vmatpush1.bf16.msra.mxu0 0
    %1432 = vmatprep.subr.bf16.mxu0 0
    %1433 = vmatpush1.bf16.msra.mxu0 0
    %1434 = vmatprep.subr.bf16.mxu0 0
    %1435 = vmatpush1.bf16.msra.mxu0 0
    %1436 = vmatprep.mubr.bf16.mxu0 0
    %1437 = vmatmul.mubr.bf16.gmra.mrb[0].mxu0 %v1346
    %v1438 = vpop.f32.mrb[0].mxu0
    %v1439 = vadd.f32 %v1317, %v1438
    %v1440 = vpop.f32.mrb[0].mxu0
    %v1441 = vadd.f32 %v1317, %v1440
    %v1442 = vpop.f32.mrb[0].mxu0
    %v1443 = vadd.f32 %v1322, %v1442
    %v1444 = vpop.f32.mrb[0].mxu0
    %v1445 = vadd.f32 %v1322, %v1444
    %1446 = vmatprep.mubr.bf16.mxu0 0
    %1447 = vmatmul.mubr.bf16.gmra.mrb[0].mxu0 %v1349
    %v1448 = vpop.f32.mrb[0].mxu0
    %v1449 = vadd.f32 %v1327, %v1448
    %v1450 = vpop.f32.mrb[0].mxu0
    %v1451 = vadd.f32 %v1327, %v1450
    %v1452 = vpop.f32.mrb[0].mxu0
    %v1453 = vadd.f32 %v1332, %v1452
    %v1454 = vpop.f32.mrb[0].mxu0
    %v1455 = vadd.f32 %v1332, %v1454
    %1456 = vdwg.mxu0
    %1457 = vmatprep.subr.bf16.mxu0 %v1247
    %1458 = vmatpush1.bf16.msra.mxu0 %v1246
    %1459 = vmatprep.subr.bf16.mxu0 %v1279
    %1460 = vmatpush1.bf16.msra.mxu0 %v1278
    %1461 = vmatprep.subr.bf16.mxu0 0
    %1462 = vmatpush1.bf16.msra.mxu0 0
    %1463 = vmatprep.subr.bf16.mxu0 0
    %1464 = vmatpush1.bf16.msra.mxu0 0
    %1465 = vmatprep.subr.bf16.mxu0 0
    %1466 = vmatpush1.bf16.msra.mxu0 0
    %1467 = vmatprep.subr.bf16.mxu0 0
    %1468 = vmatpush1.bf16.msra.mxu0 0
    %1469 = vmatprep.subr.bf16.mxu0 0
    %1470 = vmatpush1.bf16.msra.mxu0 0
    %1471 = vmatprep.subr.bf16.mxu0 0
    %1472 = vmatpush1.bf16.msra.mxu0 0
    %1473 = vmatprep.subr.bf16.mxu0 0
    %1474 = vmatpush1.bf16.msra.mxu0 0
    %1475 = vmatprep.subr.bf16.mxu0 0
    %1476 = vmatpush1.bf16.msra.mxu0 0
    %1477 = vmatprep.subr.bf16.mxu0 0
    %1478 = vmatpush1.bf16.msra.mxu0 0
    %1479 = vmatprep.subr.bf16.mxu0 0
    %1480 = vmatpush1.bf16.msra.mxu0 0
    %1481 = vmatprep.subr.bf16.mxu0 0
    %1482 = vmatpush1.bf16.msra.mxu0 0
    %1483 = vmatprep.subr.bf16.mxu0 0
    %1484 = vmatpush1.bf16.msra.mxu0 0
    %1485 = vmatprep.subr.bf16.mxu0 0
    %1486 = vmatpush1.bf16.msra.mxu0 0
    %1487 = vmatprep.subr.bf16.mxu0 0
    %1488 = vmatpush1.bf16.msra.mxu0 0
    %1489 = vmatprep.mubr.bf16.mxu0 0
    %1490 = vmatmul.mubr.bf16.gmra.mrb[0].mxu0 %v1346
    %v1491 = vpop.f32.mrb[0].mxu0
    %v1492 = vadd.f32 %v1317, %v1491
    %v1493 = vpop.f32.mrb[0].mxu0
    %v1494 = vadd.f32 %v1317, %v1493
    %v1495 = vpop.f32.mrb[0].mxu0
    %v1496 = vadd.f32 %v1322, %v1495
    %v1497 = vpop.f32.mrb[0].mxu0
    %v1498 = vadd.f32 %v1322, %v1497
    %1499 = vmatprep.mubr.bf16.mxu0 0
    %1500 = vmatmul.mubr.bf16.gmra.mrb[0].mxu0 %v1349
    %v1501 = vpop.f32.mrb[0].mxu0
    %v1502 = vadd.f32 %v1327, %v1501
    %v1503 = vpop.f32.mrb[0].mxu0
    %v1504 = vadd.f32 %v1327, %v1503
    %v1505 = vpop.f32.mrb[0].mxu0
    %v1506 = vadd.f32 %v1332, %v1505
    %v1507 = vpop.f32.mrb[0].mxu0
    %v1508 = vadd.f32 %v1332, %v1507
    %1509 = vdwg.mxu0
    %1510 = vmatprep.subr.bf16.mxu0 %v1249
    %1511 = vmatpush1.bf16.msra.mxu0 %v1248
    %1512 = vmatprep.subr.bf16.mxu0 %v1281
    %1513 = vmatpush1.bf16.msra.mxu0 %v1280
    %1514 = vmatprep.subr.bf16.mxu0 0
    %1515 = vmatpush1.bf16.msra.mxu0 0
    %1516 = vmatprep.subr.bf16.mxu0 0
    %1517 = vmatpush1.bf16.msra.mxu0 0
    %1518 = vmatprep.subr.bf16.mxu0 0
    %1519 = vmatpush1.bf16.msra.mxu0 0
    %1520 = vmatprep.subr.bf16.mxu0 0
    %1521 = vmatpush1.bf16.msra.mxu0 0
    %1522 = vmatprep.subr.bf16.mxu0 0
    %1523 = vmatpush1.bf16.msra.mxu0 0
    %1524 = vmatprep.subr.bf16.mxu0 0
    %1525 = vmatpush1.bf16.msra.mxu0 0
    %1526 = vmatprep.subr.bf16.mxu0 0
    %1527 = vmatpush1.bf16.msra.mxu0 0
    %1528 = vmatprep.subr.bf16.mxu0 0
    %1529 = vmatpush1.bf16.msra.mxu0 0
    %1530 = vmatprep.subr.bf16.mxu0 0
    %1531 = vmatpush1.bf16.msra.mxu0 0
    %1532 = vmatprep.subr.bf16.mxu0 0
    %1533 = vmatpush1.bf16.msra.mxu0 0
    %1534 = vmatprep.subr.bf16.mxu0 0
    %1535 = vmatpush1.bf16.msra.mxu0 0
    %1536 = vmatprep.subr.bf16.mxu0 0
    %1537 = vmatpush1.bf16.msra.mxu0 0
    %1538 = vmatprep.subr.bf16.mxu0 0
    %1539 = vmatpush1.bf16.msra.mxu0 0
    %1540 = vmatprep.subr.bf16.mxu0 0
    %1541 = vmatpush1.bf16.msra.mxu0 0
    %1542 = vmatprep.mubr.bf16.mxu0 0
    %1543 = vmatmul.mubr.bf16.gmra.mrb[0].mxu0 %v1346
    %v1544 = vpop.f32.mrb[0].mxu0
    %v1545 = vadd.f32 %v1317, %v1544
    %v1546 = vpop.f32.mrb[0].mxu0
    %v1547 = vadd.f32 %v1317, %v1546
    %v1548 = vpop.f32.mrb[0].mxu0
    %v1549 = vadd.f32 %v1322, %v1548
    %v1550 = vpop.f32.mrb[0].mxu0
    %v1551 = vadd.f32 %v1322, %v1550
    %1552 = vmatprep.mubr.bf16.mxu0 0
    %1553 = vmatmul.mubr.bf16.gmra.mrb[0].mxu0 %v1349
    %v1554 = vpop.f32.mrb[0].mxu0
    %v1555 = vadd.f32 %v1327, %v1554
    %v1556 = vpop.f32.mrb[0].mxu0
    %v1557 = vadd.f32 %v1327, %v1556
    %v1558 = vpop.f32.mrb[0].mxu0
    %v1559 = vadd.f32 %v1332, %v1558
    %v1560 = vpop.f32.mrb[0].mxu0
    %v1561 = vadd.f32 %v1332, %v1560
    %1562 = vdwg.mxu0
    %1563 = vmatprep.subr.bf16.mxu0 %v1251
    %1564 = vmatpush1.bf16.msra.mxu0 %v1250
    %1565 = vmatprep.subr.bf16.mxu0 %v1283
    %1566 = vmatpush1.bf16.msra.mxu0 %v1282
    %1567 = vmatprep.subr.bf16.mxu0 0
    %1568 = vmatpush1.bf16.msra.mxu0 0
    %1569 = vmatprep.subr.bf16.mxu0 0
    %1570 = vmatpush1.bf16.msra.mxu0 0
    %1571 = vmatprep.subr.bf16.mxu0 0
    %1572 = vmatpush1.bf16.msra.mxu0 0
    %1573 = vmatprep.subr.bf16.mxu0 0
    %1574 = vmatpush1.bf16.msra.mxu0 0
    %1575 = vmatprep.subr.bf16.mxu0 0
    %1576 = vmatpush1.bf16.msra.mxu0 0
    %1577 = vmatprep.subr.bf16.mxu0 0
    %1578 = vmatpush1.bf16.msra.mxu0 0
    %1579 = vmatprep.subr.bf16.mxu0 0
    %1580 = vmatpush1.bf16.msra.mxu0 0
    %1581 = vmatprep.subr.bf16.mxu0 0
    %1582 = vmatpush1.bf16.msra.mxu0 0
    %1583 = vmatprep.subr.bf16.mxu0 0
    %1584 = vmatpush1.bf16.msra.mxu0 0
    %1585 = vmatprep.subr.bf16.mxu0 0
    %1586 = vmatpush1.bf16.msra.mxu0 0
    %1587 = vmatprep.subr.bf16.mxu0 0
    %1588 = vmatpush1.bf16.msra.mxu0 0
    %1589 = vmatprep.subr.bf16.mxu0 0
    %1590 = vmatpush1.bf16.msra.mxu0 0
    %1591 = vmatprep.subr.bf16.mxu0 0
    %1592 = vmatpush1.bf16.msra.mxu0 0
    %1593 = vmatprep.subr.bf16.mxu0 0
    %1594 = vmatpush1.bf16.msra.mxu0 0
    %1595 = vmatprep.mubr.bf16.mxu0 0
    %1596 = vmatmul.mubr.bf16.gmra.mrb[0].mxu0 %v1346
    %v1597 = vpop.f32.mrb[0].mxu0
    %v1598 = vadd.f32 %v1317, %v1597
    %v1599 = vpop.f32.mrb[0].mxu0
    %v1600 = vadd.f32 %v1317, %v1599
    %v1601 = vpop.f32.mrb[0].mxu0
    %v1602 = vadd.f32 %v1322, %v1601
    %v1603 = vpop.f32.mrb[0].mxu0
    %v1604 = vadd.f32 %v1322, %v1603
    %1605 = vmatprep.mubr.bf16.mxu0 0
    %1606 = vmatmul.mubr.bf16.gmra.mrb[0].mxu0 %v1349
    %v1607 = vpop.f32.mrb[0].mxu0
    %v1608 = vadd.f32 %v1327, %v1607
    %v1609 = vpop.f32.mrb[0].mxu0
    %v1610 = vadd.f32 %v1327, %v1609
    %v1611 = vpop.f32.mrb[0].mxu0
    %v1612 = vadd.f32 %v1332, %v1611
    %v1613 = vpop.f32.mrb[0].mxu0
    %v1614 = vadd.f32 %v1332, %v1613
    %1615 = vdwg.mxu0
    %1616 = vmatprep.subr.bf16.mxu0 %v1253
    %1617 = vmatpush1.bf16.msra.mxu0 %v1252
    %1618 = vmatprep.subr.bf16.mxu0 %v1285
    %1619 = vmatpush1.bf16.msra.mxu0 %v1284
    %1620 = vmatprep.subr.bf16.mxu0 0
    %1621 = vmatpush1.bf16.msra.mxu0 0
    %1622 = vmatprep.subr.bf16.mxu0 0
    %1623 = vmatpush1.bf16.msra.mxu0 0
    %1624 = vmatprep.subr.bf16.mxu0 0
    %1625 = vmatpush1.bf16.msra.mxu0 0
    %1626 = vmatprep.subr.bf16.mxu0 0
    %1627 = vmatpush1.bf16.msra.mxu0 0
    %1628 = vmatprep.subr.bf16.mxu0 0
    %1629 = vmatpush1.bf16.msra.mxu0 0
    %1630 = vmatprep.subr.bf16.mxu0 0
    %1631 = vmatpush1.bf16.msra.mxu0 0
    %1632 = vmatprep.subr.bf16.mxu0 0
    %1633 = vmatpush1.bf16.msra.mxu0 0
    %1634 = vmatprep.subr.bf16.mxu0 0
    %1635 = vmatpush1.bf16.msra.mxu0 0
    %1636 = vmatprep.subr.bf16.mxu0 0
    %1637 = vmatpush1.bf16.msra.mxu0 0
    %1638 = vmatprep.subr.bf16.mxu0 0
    %1639 = vmatpush1.bf16.msra.mxu0 0
    %1640 = vmatprep.subr.bf16.mxu0 0
    %1641 = vmatpush1.bf16.msra.mxu0 0
    %1642 = vmatprep.subr.bf16.mxu0 0
    %1643 = vmatpush1.bf16.msra.mxu0 0
    %1644 = vmatprep.subr.bf16.mxu0 0
    %1645 = vmatpush1.bf16.msra.mxu0 0
    %1646 = vmatprep.subr.bf16.mxu0 0
    %1647 = vmatpush1.bf16.msra.mxu0 0
    %1648 = vmatprep.mubr.bf16.mxu0 0
    %1649 = vmatmul.mubr.bf16.gmra.mrb[0].mxu0 %v1346
    %v1650 = vpop.f32.mrb[0].mxu0
    %v1651 = vadd.f32 %v1317, %v1650
    %v1652 = vpop.f32.mrb[0].mxu0
    %v1653 = vadd.f32 %v1317, %v1652
    %v1654 = vpop.f32.mrb[0].mxu0
    %v1655 = vadd.f32 %v1322, %v1654
    %v1656 = vpop.f32.mrb[0].mxu0
    %v1657 = vadd.f32 %v1322, %v1656
    %1658 = vmatprep.mubr.bf16.mxu0 0
    %1659 = vmatmul.mubr.bf16.gmra.mrb[0].mxu0 %v1349
    %v1660 = vpop.f32.mrb[0].mxu0
    %v1661 = vadd.f32 %v1327, %v1660
    %v1662 = vpop.f32.mrb[0].mxu0
    %v1663 = vadd.f32 %v1327, %v1662
    %v1664 = vpop.f32.mrb[0].mxu0
    %v1665 = vadd.f32 %v1332, %v1664
    %v1666 = vpop.f32.mrb[0].mxu0
    %v1667 = vadd.f32 %v1332, %v1666
    %1668 = vdwg.mxu0
    %1669 = vmatprep.subr.bf16.mxu0 %v1255
    %1670 = vmatpush1.bf16.msra.mxu0 %v1254
    %1671 = vmatprep.subr.bf16.mxu0 %v1287
    %1672 = vmatpush1.bf16.msra.mxu0 %v1286
    %1673 = vmatprep.subr.bf16.mxu0 0
    %1674 = vmatpush1.bf16.msra.mxu0 0
    %1675 = vmatprep.subr.bf16.mxu0 0
    %1676 = vmatpush1.bf16.msra.mxu0 0
    %1677 = vmatprep.subr.bf16.mxu0 0
    %1678 = vmatpush1.bf16.msra.mxu0 0
    %1679 = vmatprep.subr.bf16.mxu0 0
    %1680 = vmatpush1.bf16.msra.mxu0 0
    %1681 = vmatprep.subr.bf16.mxu0 0
    %1682 = vmatpush1.bf16.msra.mxu0 0
    %1683 = vmatprep.subr.bf16.mxu0 0
    %1684 = vmatpush1.bf16.msra.mxu0 0
    %1685 = vmatprep.subr.bf16.mxu0 0
    %1686 = vmatpush1.bf16.msra.mxu0 0
    %1687 = vmatprep.subr.bf16.mxu0 0
    %1688 = vmatpush1.bf16.msra.mxu0 0
    %1689 = vmatprep.subr.bf16.mxu0 0
    %1690 = vmatpush1.bf16.msra.mxu0 0
    %1691 = vmatprep.subr.bf16.mxu0 0
    %1692 = vmatpush1.bf16.msra.mxu0 0
    %1693 = vmatprep.subr.bf16.mxu0 0
    %1694 = vmatpush1.bf16.msra.mxu0 0
    %1695 = vmatprep.subr.bf16.mxu0 0
    %1696 = vmatpush1.bf16.msra.mxu0 0
    %1697 = vmatprep.subr.bf16.mxu0 0
    %1698 = vmatpush1.bf16.msra.mxu0 0
    %1699 = vmatprep.subr.bf16.mxu0 0
    %1700 = vmatpush1.bf16.msra.mxu0 0
    %1701 = vmatprep.mubr.bf16.mxu0 0
    %1702 = vmatmul.mubr.bf16.gmra.mrb[0].mxu0 %v1346
    %v1703 = vpop.f32.mrb[0].mxu0
    %v1704 = vadd.f32 %v1317, %v1703
    %v1705 = vpop.f32.mrb[0].mxu0
    %v1706 = vadd.f32 %v1317, %v1705
    %v1707 = vpop.f32.mrb[0].mxu0
    %v1708 = vadd.f32 %v1322, %v1707
    %v1709 = vpop.f32.mrb[0].mxu0
    %v1710 = vadd.f32 %v1322, %v1709
    %1711 = vmatprep.mubr.bf16.mxu0 0
    %1712 = vmatmul.mubr.bf16.gmra.mrb[0].mxu0 %v1349
    %v1713 = vpop.f32.mrb[0].mxu0
    %v1714 = vadd.f32 %v1327, %v1713
    %v1715 = vpop.f32.mrb[0].mxu0
    %v1716 = vadd.f32 %v1327, %v1715
    %v1717 = vpop.f32.mrb[0].mxu0
    %v1718 = vadd.f32 %v1332, %v1717
    %v1719 = vpop.f32.mrb[0].mxu0
    %v1720 = vadd.f32 %v1332, %v1719
    %1721 = vdwg.mxu0
    %1722 = vmatprep.subr.bf16.mxu0 %v1257
    %1723 = vmatpush1.bf16.msra.mxu0 %v1256
    %1724 = vmatprep.subr.bf16.mxu0 %v1289
    %1725 = vmatpush1.bf16.msra.mxu0 %v1288
    %1726 = vmatprep.subr.bf16.mxu0 0
    %1727 = vmatpush1.bf16.msra.mxu0 0
    %1728 = vmatprep.subr.bf16.mxu0 0
    %1729 = vmatpush1.bf16.msra.mxu0 0
    %1730 = vmatprep.subr.bf16.mxu0 0
    %1731 = vmatpush1.bf16.msra.mxu0 0
    %1732 = vmatprep.subr.bf16.mxu0 0
    %1733 = vmatpush1.bf16.msra.mxu0 0
    %1734 = vmatprep.subr.bf16.mxu0 0
    %1735 = vmatpush1.bf16.msra.mxu0 0
    %1736 = vmatprep.subr.bf16.mxu0 0
    %1737 = vmatpush1.bf16.msra.mxu0 0
    %1738 = vmatprep.subr.bf16.mxu0 0
    %1739 = vmatpush1.bf16.msra.mxu0 0
    %1740 = vmatprep.subr.bf16.mxu0 0
    %1741 = vmatpush1.bf16.msra.mxu0 0
    %1742 = vmatprep.subr.bf16.mxu0 0
    %1743 = vmatpush1.bf16.msra.mxu0 0
    %1744 = vmatprep.subr.bf16.mxu0 0
    %1745 = vmatpush1.bf16.msra.mxu0 0
    %1746 = vmatprep.subr.bf16.mxu0 0
    %1747 = vmatpush1.bf16.msra.mxu0 0
    %1748 = vmatprep.subr.bf16.mxu0 0
    %1749 = vmatpush1.bf16.msra.mxu0 0
    %1750 = vmatprep.subr.bf16.mxu0 0
    %1751 = vmatpush1.bf16.msra.mxu0 0
    %1752 = vmatprep.subr.bf16.mxu0 0
    %1753 = vmatpush1.bf16.msra.mxu0 0
    %1754 = vmatprep.mubr.bf16.mxu0 0
    %1755 = vmatmul.mubr.bf16.gmra.mrb[0].mxu0 %v1346
    %v1756 = vpop.f32.mrb[0].mxu0
    %v1757 = vadd.f32 %v1317, %v1756
    %v1758 = vpop.f32.mrb[0].mxu0
    %v1759 = vadd.f32 %v1317, %v1758
    %v1760 = vpop.f32.mrb[0].mxu0
    %v1761 = vadd.f32 %v1322, %v1760
    %v1762 = vpop.f32.mrb[0].mxu0
    %v1763 = vadd.f32 %v1322, %v1762
    %1764 = vmatprep.mubr.bf16.mxu0 0
    %1765 = vmatmul.mubr.bf16.gmra.mrb[0].mxu0 %v1349
    %v1766 = vpop.f32.mrb[0].mxu0
    %v1767 = vadd.f32 %v1327, %v1766
    %v1768 = vpop.f32.mrb[0].mxu0
    %v1769 = vadd.f32 %v1327, %v1768
    %v1770 = vpop.f32.mrb[0].mxu0
    %v1771 = vadd.f32 %v1332, %v1770
    %v1772 = vpop.f32.mrb[0].mxu0
    %v1773 = vadd.f32 %v1332, %v1772
    %1774 = vdwg.mxu0
    %1775 = vmatprep.subr.bf16.mxu0 %v1259
    %1776 = vmatpush1.bf16.msra.mxu0 %v1258
    %1777 = vmatprep.subr.bf16.mxu0 %v1291
    %1778 = vmatpush1.bf16.msra.mxu0 %v1290
    %1779 = vmatprep.subr.bf16.mxu0 0
    %1780 = vmatpush1.bf16.msra.mxu0 0
    %1781 = vmatprep.subr.bf16.mxu0 0
    %1782 = vmatpush1.bf16.msra.mxu0 0
    %1783 = vmatprep.subr.bf16.mxu0 0
    %1784 = vmatpush1.bf16.msra.mxu0 0
    %1785 = vmatprep.subr.bf16.mxu0 0
    %1786 = vmatpush1.bf16.msra.mxu0 0
    %1787 = vmatprep.subr.bf16.mxu0 0
    %1788 = vmatpush1.bf16.msra.mxu0 0
    %1789 = vmatprep.subr.bf16.mxu0 0
    %1790 = vmatpush1.bf16.msra.mxu0 0
    %1791 = vmatprep.subr.bf16.mxu0 0
    %1792 = vmatpush1.bf16.msra.mxu0 0
    %1793 = vmatprep.subr.bf16.mxu0 0
    %1794 = vmatpush1.bf16.msra.mxu0 0
    %1795 = vmatprep.subr.bf16.mxu0 0
    %1796 = vmatpush1.bf16.msra.mxu0 0
    %1797 = vmatprep.subr.bf16.mxu0 0
    %1798 = vmatpush1.bf16.msra.mxu0 0
    %1799 = vmatprep.subr.bf16.mxu0 0
    %1800 = vmatpush1.bf16.msra.mxu0 0
    %1801 = vmatprep.subr.bf16.mxu0 0
    %1802 = vmatpush1.bf16.msra.mxu0 0
    %1803 = vmatprep.subr.bf16.mxu0 0
    %1804 = vmatpush1.bf16.msra.mxu0 0
    %1805 = vmatprep.subr.bf16.mxu0 0
    %1806 = vmatpush1.bf16.msra.mxu0 0
    %1807 = vmatprep.mubr.bf16.mxu0 0
    %1808 = vmatmul.mubr.bf16.gmra.mrb[0].mxu0 %v1346
    %v1809 = vpop.f32.mrb[0].mxu0
    %v1810 = vadd.f32 %v1317, %v1809
    %v1811 = vpop.f32.mrb[0].mxu0
    %v1812 = vadd.f32 %v1317, %v1811
    %v1813 = vpop.f32.mrb[0].mxu0
    %v1814 = vadd.f32 %v1322, %v1813
    %v1815 = vpop.f32.mrb[0].mxu0
    %v1816 = vadd.f32 %v1322, %v1815
    %1817 = vmatprep.mubr.bf16.mxu0 0
    %1818 = vmatmul.mubr.bf16.gmra.mrb[0].mxu0 %v1349
    %v1819 = vpop.f32.mrb[0].mxu0
    %v1820 = vadd.f32 %v1327, %v1819
    %v1821 = vpop.f32.mrb[0].mxu0
    %v1822 = vadd.f32 %v1327, %v1821
    %v1823 = vpop.f32.mrb[0].mxu0
    %v1824 = vadd.f32 %v1332, %v1823
    %v1825 = vpop.f32.mrb[0].mxu0
    %v1826 = vadd.f32 %v1332, %v1825
    %1827 = vdwg.mxu0
    %1828 = vmatprep.subr.bf16.mxu0 %v1261
    %1829 = vmatpush1.bf16.msra.mxu0 %v1260
    %1830 = vmatprep.subr.bf16.mxu0 %v1293
    %1831 = vmatpush1.bf16.msra.mxu0 %v1292
    %1832 = vmatprep.subr.bf16.mxu0 0
    %1833 = vmatpush1.bf16.msra.mxu0 0
    %1834 = vmatprep.subr.bf16.mxu0 0
    %1835 = vmatpush1.bf16.msra.mxu0 0
    %1836 = vmatprep.subr.bf16.mxu0 0
    %1837 = vmatpush1.bf16.msra.mxu0 0
    %1838 = vmatprep.subr.bf16.mxu0 0
    %1839 = vmatpush1.bf16.msra.mxu0 0
    %1840 = vmatprep.subr.bf16.mxu0 0
    %1841 = vmatpush1.bf16.msra.mxu0 0
    %1842 = vmatprep.subr.bf16.mxu0 0
    %1843 = vmatpush1.bf16.msra.mxu0 0
    %1844 = vmatprep.subr.bf16.mxu0 0
    %1845 = vmatpush1.bf16.msra.mxu0 0
    %1846 = vmatprep.subr.bf16.mxu0 0
    %1847 = vmatpush1.bf16.msra.mxu0 0
    %1848 = vmatprep.subr.bf16.mxu0 0
    %1849 = vmatpush1.bf16.msra.mxu0 0
    %1850 = vmatprep.subr.bf16.mxu0 0
    %1851 = vmatpush1.bf16.msra.mxu0 0
    %1852 = vmatprep.subr.bf16.mxu0 0
    %1853 = vmatpush1.bf16.msra.mxu0 0
    %1854 = vmatprep.subr.bf16.mxu0 0
    %1855 = vmatpush1.bf16.msra.mxu0 0
    %1856 = vmatprep.subr.bf16.mxu0 0
    %1857 = vmatpush1.bf16.msra.mxu0 0
    %1858 = vmatprep.subr.bf16.mxu0 0
    %1859 = vmatpush1.bf16.msra.mxu0 0
    %1860 = vmatprep.mubr.bf16.mxu0 0
    %1861 = vmatmul.mubr.bf16.gmra.mrb[0].mxu0 %v1346
    %v1862 = vpop.f32.mrb[0].mxu0
    %v1863 = vadd.f32 %v1317, %v1862
    %v1864 = vpop.f32.mrb[0].mxu0
    %v1865 = vadd.f32 %v1317, %v1864
    %v1866 = vpop.f32.mrb[0].mxu0
    %v1867 = vadd.f32 %v1322, %v1866
    %v1868 = vpop.f32.mrb[0].mxu0
    %v1869 = vadd.f32 %v1322, %v1868
    %1870 = vmatprep.mubr.bf16.mxu0 0
    %1871 = vmatmul.mubr.bf16.gmra.mrb[0].mxu0 %v1349
    %v1872 = vpop.f32.mrb[0].mxu0
    %v1873 = vadd.f32 %v1327, %v1872
    %v1874 = vpop.f32.mrb[0].mxu0
    %v1875 = vadd.f32 %v1327, %v1874
    %v1876 = vpop.f32.mrb[0].mxu0
    %v1877 = vadd.f32 %v1332, %v1876
    %v1878 = vpop.f32.mrb[0].mxu0
    %v1879 = vadd.f32 %v1332, %v1878
    %1880 = vdwg.mxu0
    %1881 = vmatprep.subr.bf16.mxu0 %v1263
    %1882 = vmatpush1.bf16.msra.mxu0 %v1262
    %1883 = vmatprep.subr.bf16.mxu0 %v1295
    %1884 = vmatpush1.bf16.msra.mxu0 %v1294
    %1885 = vmatprep.subr.bf16.mxu0 0
    %1886 = vmatpush1.bf16.msra.mxu0 0
    %1887 = vmatprep.subr.bf16.mxu0 0
    %1888 = vmatpush1.bf16.msra.mxu0 0
    %1889 = vmatprep.subr.bf16.mxu0 0
    %1890 = vmatpush1.bf16.msra.mxu0 0
    %1891 = vmatprep.subr.bf16.mxu0 0
    %1892 = vmatpush1.bf16.msra.mxu0 0
    %1893 = vmatprep.subr.bf16.mxu0 0
    %1894 = vmatpush1.bf16.msra.mxu0 0
    %1895 = vmatprep.subr.bf16.mxu0 0
    %1896 = vmatpush1.bf16.msra.mxu0 0
    %1897 = vmatprep.subr.bf16.mxu0 0
    %1898 = vmatpush1.bf16.msra.mxu0 0
    %1899 = vmatprep.subr.bf16.mxu0 0
    %1900 = vmatpush1.bf16.msra.mxu0 0
    %1901 = vmatprep.subr.bf16.mxu0 0
    %1902 = vmatpush1.bf16.msra.mxu0 0
    %1903 = vmatprep.subr.bf16.mxu0 0
    %1904 = vmatpush1.bf16.msra.mxu0 0
    %1905 = vmatprep.subr.bf16.mxu0 0
    %1906 = vmatpush1.bf16.msra.mxu0 0
    %1907 = vmatprep.subr.bf16.mxu0 0
    %1908 = vmatpush1.bf16.msra.mxu0 0
    %1909 = vmatprep.subr.bf16.mxu0 0
    %1910 = vmatpush1.bf16.msra.mxu0 0
    %1911 = vmatprep.subr.bf16.mxu0 0
    %1912 = vmatpush1.bf16.msra.mxu0 0
    %1913 = vmatprep.mubr.bf16.mxu0 0
    %1914 = vmatmul.mubr.bf16.gmra.mrb[0].mxu0 %v1346
    %v1915 = vpop.f32.mrb[0].mxu0
    %v1916 = vadd.f32 %v1317, %v1915
    %v1917 = vpop.f32.mrb[0].mxu0
    %v1918 = vadd.f32 %v1317, %v1917
    %v1919 = vpop.f32.mrb[0].mxu0
    %v1920 = vadd.f32 %v1322, %v1919
    %v1921 = vpop.f32.mrb[0].mxu0
    %v1922 = vadd.f32 %v1322, %v1921
    %1923 = vmatprep.mubr.bf16.mxu0 0
    %1924 = vmatmul.mubr.bf16.gmra.mrb[0].mxu0 %v1349
    %v1925 = vpop.f32.mrb[0].mxu0
    %v1926 = vadd.f32 %v1327, %v1925
    %v1927 = vpop.f32.mrb[0].mxu0
    %v1928 = vadd.f32 %v1327, %v1927
    %v1929 = vpop.f32.mrb[0].mxu0
    %v1930 = vadd.f32 %v1332, %v1929
    %v1931 = vpop.f32.mrb[0].mxu0
    %v1932 = vadd.f32 %v1332, %v1931
    %1933 = vdwg.mxu0
    %1934 = vmatprep.subr.bf16.mxu0 %v1265
    %1935 = vmatpush1.bf16.msra.mxu0 %v1264
    %1936 = vmatprep.subr.bf16.mxu0 %v1297
    %1937 = vmatpush1.bf16.msra.mxu0 %v1296
    %1938 = vmatprep.subr.bf16.mxu0 0
    %1939 = vmatpush1.bf16.msra.mxu0 0
    %1940 = vmatprep.subr.bf16.mxu0 0
    %1941 = vmatpush1.bf16.msra.mxu0 0
    %1942 = vmatprep.subr.bf16.mxu0 0
    %1943 = vmatpush1.bf16.msra.mxu0 0
    %1944 = vmatprep.subr.bf16.mxu0 0
    %1945 = vmatpush1.bf16.msra.mxu0 0
    %1946 = vmatprep.subr.bf16.mxu0 0
    %1947 = vmatpush1.bf16.msra.mxu0 0
    %1948 = vmatprep.subr.bf16.mxu0 0
    %1949 = vmatpush1.bf16.msra.mxu0 0
    %1950 = vmatprep.subr.bf16.mxu0 0
    %1951 = vmatpush1.bf16.msra.mxu0 0
    %1952 = vmatprep.subr.bf16.mxu0 0
    %1953 = vmatpush1.bf16.msra.mxu0 0
    %1954 = vmatprep.subr.bf16.mxu0 0
    %1955 = vmatpush1.bf16.msra.mxu0 0
    %1956 = vmatprep.subr.bf16.mxu0 0
    %1957 = vmatpush1.bf16.msra.mxu0 0
    %1958 = vmatprep.subr.bf16.mxu0 0
    %1959 = vmatpush1.bf16.msra.mxu0 0
    %1960 = vmatprep.subr.bf16.mxu0 0
    %1961 = vmatpush1.bf16.msra.mxu0 0
    %1962 = vmatprep.subr.bf16.mxu0 0
    %1963 = vmatpush1.bf16.msra.mxu0 0
    %1964 = vmatprep.subr.bf16.mxu0 0
    %1965 = vmatpush1.bf16.msra.mxu0 0
    %1966 = vmatprep.mubr.bf16.mxu0 0
    %1967 = vmatmul.mubr.bf16.gmra.mrb[0].mxu0 %v1346
    %v1968 = vpop.f32.mrb[0].mxu0
    %v1969 = vadd.f32 %v1317, %v1968
    %v1970 = vpop.f32.mrb[0].mxu0
    %v1971 = vadd.f32 %v1317, %v1970
    %v1972 = vpop.f32.mrb[0].mxu0
    %v1973 = vadd.f32 %v1322, %v1972
    %v1974 = vpop.f32.mrb[0].mxu0
    %v1975 = vadd.f32 %v1322, %v1974
    %1976 = vmatprep.mubr.bf16.mxu0 0
    %1977 = vmatmul.mubr.bf16.gmra.mrb[0].mxu0 %v1349
    %v1978 = vpop.f32.mrb[0].mxu0
    %v1979 = vadd.f32 %v1327, %v1978
    %v1980 = vpop.f32.mrb[0].mxu0
    %v1981 = vadd.f32 %v1327, %v1980
    %v1982 = vpop.f32.mrb[0].mxu0
    %v1983 = vadd.f32 %v1332, %v1982
    %v1984 = vpop.f32.mrb[0].mxu0
    %v1985 = vadd.f32 %v1332, %v1984
    %1986 = vdwg.mxu0
    %1987 = vmatprep.subr.bf16.mxu0 %v1267
    %1988 = vmatpush1.bf16.msra.mxu0 %v1266
    %1989 = vmatprep.subr.bf16.mxu0 %v1299
    %1990 = vmatpush1.bf16.msra.mxu0 %v1298
    %1991 = vmatprep.subr.bf16.mxu0 0
    %1992 = vmatpush1.bf16.msra.mxu0 0
    %1993 = vmatprep.subr.bf16.mxu0 0
    %1994 = vmatpush1.bf16.msra.mxu0 0
    %1995 = vmatprep.subr.bf16.mxu0 0
    %1996 = vmatpush1.bf16.msra.mxu0 0
    %1997 = vmatprep.subr.bf16.mxu0 0
    %1998 = vmatpush1.bf16.msra.mxu0 0
    %1999 = vmatprep.subr.bf16.mxu0 0
    %2000 = vmatpush1.bf16.msra.mxu0 0
    %2001 = vmatprep.subr.bf16.mxu0 0
    %2002 = vmatpush1.bf16.msra.mxu0 0
    %2003 = vmatprep.subr.bf16.mxu0 0
    %2004 = vmatpush1.bf16.msra.mxu0 0
    %2005 = vmatprep.subr.bf16.mxu0 0
    %2006 = vmatpush1.bf16.msra.mxu0 0
    %2007 = vmatprep.subr.bf16.mxu0 0
    %2008 = vmatpush1.bf16.msra.mxu0 0
    %2009 = vmatprep.subr.bf16.mxu0 0
    %2010 = vmatpush1.bf16.msra.mxu0 0
    %2011 = vmatprep.subr.bf16.mxu0 0
    %2012 = vmatpush1.bf16.msra.mxu0 0
    %2013 = vmatprep.subr.bf16.mxu0 0
    %2014 = vmatpush1.bf16.msra.mxu0 0
    %2015 = vmatprep.subr.bf16.mxu0 0
    %2016 = vmatpush1.bf16.msra.mxu0 0
    %2017 = vmatprep.subr.bf16.mxu0 0
    %2018 = vmatpush1.bf16.msra.mxu0 0
    %2019 = vmatprep.mubr.bf16.mxu0 0
    %2020 = vmatmul.mubr.bf16.gmra.mrb[0].mxu0 %v1346
    %v2021 = vpop.f32.mrb[0].mxu0
    %v2022 = vadd.f32 %v1317, %v2021
    %v2023 = vpop.f32.mrb[0].mxu0
    %v2024 = vadd.f32 %v1317, %v2023
    %v2025 = vpop.f32.mrb[0].mxu0
    %v2026 = vadd.f32 %v1322, %v2025
    %v2027 = vpop.f32.mrb[0].mxu0
    %v2028 = vadd.f32 %v1322, %v2027
    %2029 = vmatprep.mubr.bf16.mxu0 0
    %2030 = vmatmul.mubr.bf16.gmra.mrb[0].mxu0 %v1349
    %v2031 = vpop.f32.mrb[0].mxu0
    %v2032 = vadd.f32 %v1327, %v2031
    %v2033 = vpop.f32.mrb[0].mxu0
    %v2034 = vadd.f32 %v1327, %v2033
    %v2035 = vpop.f32.mrb[0].mxu0
    %v2036 = vadd.f32 %v1332, %v2035
    %v2037 = vpop.f32.mrb[0].mxu0
    %v2038 = vadd.f32 %v1332, %v2037
    %2039 = vdwg.mxu0
    %2040 = vmatprep.subr.bf16.mxu0 %v1269
    %2041 = vmatpush1.bf16.msra.mxu0 %v1268
    %2042 = vmatprep.subr.bf16.mxu0 %v1301
    %2043 = vmatpush1.bf16.msra.mxu0 %v1300
    %2044 = vmatprep.subr.bf16.mxu0 0
    %2045 = vmatpush1.bf16.msra.mxu0 0
    %2046 = vmatprep.subr.bf16.mxu0 0
    %2047 = vmatpush1.bf16.msra.mxu0 0
    %2048 = vmatprep.subr.bf16.mxu0 0
    %2049 = vmatpush1.bf16.msra.mxu0 0
    %2050 = vmatprep.subr.bf16.mxu0 0
    %2051 = vmatpush1.bf16.msra.mxu0 0
    %2052 = vmatprep.subr.bf16.mxu0 0
    %2053 = vmatpush1.bf16.msra.mxu0 0
    %2054 = vmatprep.subr.bf16.mxu0 0
    %2055 = vmatpush1.bf16.msra.mxu0 0
    %2056 = vmatprep.subr.bf16.mxu0 0
    %2057 = vmatpush1.bf16.msra.mxu0 0
    %2058 = vmatprep.subr.bf16.mxu0 0
    %2059 = vmatpush1.bf16.msra.mxu0 0
    %2060 = vmatprep.subr.bf16.mxu0 0
    %2061 = vmatpush1.bf16.msra.mxu0 0
    %2062 = vmatprep.subr.bf16.mxu0 0
    %2063 = vmatpush1.bf16.msra.mxu0 0
    %2064 = vmatprep.subr.bf16.mxu0 0
    %2065 = vmatpush1.bf16.msra.mxu0 0
    %2066 = vmatprep.subr.bf16.mxu0 0
    %2067 = vmatpush1.bf16.msra.mxu0 0
    %2068 = vmatprep.subr.bf16.mxu0 0
    %2069 = vmatpush1.bf16.msra.mxu0 0
    %2070 = vmatprep.subr.bf16.mxu0 0
    %2071 = vmatpush1.bf16.msra.mxu0 0
    %2072 = vmatprep.mubr.bf16.mxu0 0
    %2073 = vmatmul.mubr.bf16.gmra.mrb[0].mxu0 %v1346
    %v2074 = vpop.f32.mrb[0].mxu0
    %v2075 = vadd.f32 %v1317, %v2074
    %v2076 = vpop.f32.mrb[0].mxu0
    %v2077 = vadd.f32 %v1317, %v2076
    %v2078 = vpop.f32.mrb[0].mxu0
    %v2079 = vadd.f32 %v1322, %v2078
    %v2080 = vpop.f32.mrb[0].mxu0
    %v2081 = vadd.f32 %v1322, %v2080
    %2082 = vmatprep.mubr.bf16.mxu0 0
    %2083 = vmatmul.mubr.bf16.gmra.mrb[0].mxu0 %v1349
    %v2084 = vpop.f32.mrb[0].mxu0
    %v2085 = vadd.f32 %v1327, %v2084
    %v2086 = vpop.f32.mrb[0].mxu0
    %v2087 = vadd.f32 %v1327, %v2086
    %v2088 = vpop.f32.mrb[0].mxu0
    %v2089 = vadd.f32 %v1332, %v2088
    %v2090 = vpop.f32.mrb[0].mxu0
    %v2091 = vadd.f32 %v1332, %v2090
    %2092 = vdwg.mxu0
    %2093 = vmatprep.subr.bf16.mxu0 %v1271
    %2094 = vmatpush1.bf16.msra.mxu0 %v1270
    %2095 = vmatprep.subr.bf16.mxu0 %v1303
    %2096 = vmatpush1.bf16.msra.mxu0 %v1302
    %2097 = vmatprep.subr.bf16.mxu0 0
    %2098 = vmatpush1.bf16.msra.mxu0 0
    %2099 = vmatprep.subr.bf16.mxu0 0
    %2100 = vmatpush1.bf16.msra.mxu0 0
    %2101 = vmatprep.subr.bf16.mxu0 0
    %2102 = vmatpush1.bf16.msra.mxu0 0
    %2103 = vmatprep.subr.bf16.mxu0 0
    %2104 = vmatpush1.bf16.msra.mxu0 0
    %2105 = vmatprep.subr.bf16.mxu0 0
    %2106 = vmatpush1.bf16.msra.mxu0 0
    %2107 = vmatprep.subr.bf16.mxu0 0
    %2108 = vmatpush1.bf16.msra.mxu0 0
    %2109 = vmatprep.subr.bf16.mxu0 0
    %2110 = vmatpush1.bf16.msra.mxu0 0
    %2111 = vmatprep.subr.bf16.mxu0 0
    %2112 = vmatpush1.bf16.msra.mxu0 0
    %2113 = vmatprep.subr.bf16.mxu0 0
    %2114 = vmatpush1.bf16.msra.mxu0 0
    %2115 = vmatprep.subr.bf16.mxu0 0
    %2116 = vmatpush1.bf16.msra.mxu0 0
    %2117 = vmatprep.subr.bf16.mxu0 0
    %2118 = vmatpush1.bf16.msra.mxu0 0
    %2119 = vmatprep.subr.bf16.mxu0 0
    %2120 = vmatpush1.bf16.msra.mxu0 0
    %2121 = vmatprep.subr.bf16.mxu0 0
    %2122 = vmatpush1.bf16.msra.mxu0 0
    %2123 = vmatprep.subr.bf16.mxu0 0
    %2124 = vmatpush1.bf16.msra.mxu0 0
    %2125 = vmatprep.mubr.bf16.mxu0 0
    %2126 = vmatmul.mubr.bf16.gmra.mrb[0].mxu0 %v1346
    %v2127 = vpop.f32.mrb[0].mxu0
    %v2128 = vadd.f32 %v1317, %v2127
    %v2129 = vpop.f32.mrb[0].mxu0
    %v2130 = vadd.f32 %v1317, %v2129
    %v2131 = vpop.f32.mrb[0].mxu0
    %v2132 = vadd.f32 %v1322, %v2131
    %v2133 = vpop.f32.mrb[0].mxu0
    %v2134 = vadd.f32 %v1322, %v2133
    %2135 = vmatprep.mubr.bf16.mxu0 0
    %2136 = vmatmul.mubr.bf16.gmra.mrb[0].mxu0 %v1349
    %v2137 = vpop.f32.mrb[0].mxu0
    %v2138 = vadd.f32 %v1327, %v2137
    %v2139 = vpop.f32.mrb[0].mxu0
    %v2140 = vadd.f32 %v1327, %v2139
    %v2141 = vpop.f32.mrb[0].mxu0
    %v2142 = vadd.f32 %v1332, %v2141
    %v2143 = vpop.f32.mrb[0].mxu0
    %v2144 = vadd.f32 %v1332, %v2143
    %2145 = vdwg.mxu0
    %2146 = vmatprep.subr.bf16.mxu0 %v1273
    %2147 = vmatpush1.bf16.msra.mxu0 %v1272
    %2148 = vmatprep.subr.bf16.mxu0 %v1305
    %2149 = vmatpush1.bf16.msra.mxu0 %v1304
    %2150 = vmatprep.subr.bf16.mxu0 0
    %2151 = vmatpush1.bf16.msra.mxu0 0
    %2152 = vmatprep.subr.bf16.mxu0 0
    %2153 = vmatpush1.bf16.msra.mxu0 0
    %2154 = vmatprep.subr.bf16.mxu0 0
    %2155 = vmatpush1.bf16.msra.mxu0 0
    %2156 = vmatprep.subr.bf16.mxu0 0
    %2157 = vmatpush1.bf16.msra.mxu0 0
    %2158 = vmatprep.subr.bf16.mxu0 0
    %2159 = vmatpush1.bf16.msra.mxu0 0
    %2160 = vmatprep.subr.bf16.mxu0 0
    %2161 = vmatpush1.bf16.msra.mxu0 0
    %2162 = vmatprep.subr.bf16.mxu0 0
    %2163 = vmatpush1.bf16.msra.mxu0 0
    %2164 = vmatprep.subr.bf16.mxu0 0
    %2165 = vmatpush1.bf16.msra.mxu0 0
    %2166 = vmatprep.subr.bf16.mxu0 0
    %2167 = vmatpush1.bf16.msra.mxu0 0
    %2168 = vmatprep.subr.bf16.mxu0 0
    %2169 = vmatpush1.bf16.msra.mxu0 0
    %2170 = vmatprep.subr.bf16.mxu0 0
    %2171 = vmatpush1.bf16.msra.mxu0 0
    %2172 = vmatprep.subr.bf16.mxu0 0
    %2173 = vmatpush1.bf16.msra.mxu0 0
    %2174 = vmatprep.subr.bf16.mxu0 0
    %2175 = vmatpush1.bf16.msra.mxu0 0
    %2176 = vmatprep.subr.bf16.mxu0 0
    %2177 = vmatpush1.bf16.msra.mxu0 0
    %2178 = vmatprep.mubr.bf16.mxu0 0
    %2179 = vmatmul.mubr.bf16.gmra.mrb[0].mxu0 %v1346
    %v2180 = vpop.f32.mrb[0].mxu0
    %v2181 = vadd.f32 %v1317, %v2180
    %v2182 = vpop.f32.mrb[0].mxu0
    %v2183 = vadd.f32 %v1317, %v2182
    %v2184 = vpop.f32.mrb[0].mxu0
    %v2185 = vadd.f32 %v1322, %v2184
    %v2186 = vpop.f32.mrb[0].mxu0
    %v2187 = vadd.f32 %v1322, %v2186
    %2188 = vmatprep.mubr.bf16.mxu0 0
    %2189 = vmatmul.mubr.bf16.gmra.mrb[0].mxu0 %v1349
    %v2190 = vpop.f32.mrb[0].mxu0
    %v2191 = vadd.f32 %v1327, %v2190
    %v2192 = vpop.f32.mrb[0].mxu0
    %v2193 = vadd.f32 %v1327, %v2192
    %v2194 = vpop.f32.mrb[0].mxu0
    %v2195 = vadd.f32 %v1332, %v2194
    %v2196 = vpop.f32.mrb[0].mxu0
    %v2197 = vadd.f32 %v1332, %v2196
    %2198 = vdwg.mxu0
    %v2199 = vmax.f32 %v1386, 0.0
    %v2200 = vmax.f32 %v1388, 0.0
    %v2201 = vmax.f32 %v1439, 0.0
    %v2202 = vmax.f32 %v1441, 0.0
    %v2203 = vmax.f32 %v1492, 0.0
    %v2204 = vmax.f32 %v1494, 0.0
    %v2205 = vmax.f32 %v1545, 0.0
    %v2206 = vmax.f32 %v1547, 0.0
    %v2207 = vmax.f32 %v1598, 0.0
    %v2208 = vmax.f32 %v1600, 0.0
    %v2209 = vmax.f32 %v1651, 0.0
    %v2210 = vmax.f32 %v1653, 0.0
    %v2211 = vmax.f32 %v1704, 0.0
    %v2212 = vmax.f32 %v1706, 0.0
    %v2213 = vmax.f32 %v1757, 0.0
    %v2214 = vmax.f32 %v1759, 0.0
    %v2215 = vmax.f32 %v1810, 0.0
    %v2216 = vmax.f32 %v1812, 0.0
    %v2217 = vmax.f32 %v1863, 0.0
    %v2218 = vmax.f32 %v1865, 0.0
    %v2219 = vmax.f32 %v1916, 0.0
    %v2220 = vmax.f32 %v1918, 0.0
    %v2221 = vmax.f32 %v1969, 0.0
    %v2222 = vmax.f32 %v1971, 0.0
    %v2223 = vmax.f32 %v2022, 0.0
    %v2224 = vmax.f32 %v2024, 0.0
    %v2225 = vmax.f32 %v2075, 0.0
    %v2226 = vmax.f32 %v2077, 0.0
    %v2227 = vmax.f32 %v2128, 0.0
    %v2228 = vmax.f32 %v2130, 0.0
    %v2229 = vmax.f32 %v2181, 0.0
    %v2230 = vmax.f32 %v2183, 0.0
    %v2231 = vmax.f32 %v1390, 0.0
    %v2232 = vmax.f32 %v1392, 0.0
    %v2233 = vmax.f32 %v1443, 0.0
    %v2234 = vmax.f32 %v1445, 0.0
    %v2235 = vmax.f32 %v1496, 0.0
    %v2236 = vmax.f32 %v1498, 0.0
    %v2237 = vmax.f32 %v1549, 0.0
    %v2238 = vmax.f32 %v1551, 0.0
    %v2239 = vmax.f32 %v1602, 0.0
    %v2240 = vmax.f32 %v1604, 0.0
    %v2241 = vmax.f32 %v1655, 0.0
    %v2242 = vmax.f32 %v1657, 0.0
    %v2243 = vmax.f32 %v1708, 0.0
    %v2244 = vmax.f32 %v1710, 0.0
    %v2245 = vmax.f32 %v1761, 0.0
    %v2246 = vmax.f32 %v1763, 0.0
    %v2247 = vmax.f32 %v1814, 0.0
    %v2248 = vmax.f32 %v1816, 0.0
    %v2249 = vmax.f32 %v1867, 0.0
    %v2250 = vmax.f32 %v1869, 0.0
    %v2251 = vmax.f32 %v1920, 0.0
    %v2252 = vmax.f32 %v1922, 0.0
    %v2253 = vmax.f32 %v1973, 0.0
    %v2254 = vmax.f32 %v1975, 0.0
    %v2255 = vmax.f32 %v2026, 0.0
    %v2256 = vmax.f32 %v2028, 0.0
    %v2257 = vmax.f32 %v2079, 0.0
    %v2258 = vmax.f32 %v2081, 0.0
    %v2259 = vmax.f32 %v2132, 0.0
    %v2260 = vmax.f32 %v2134, 0.0
    %v2261 = vmax.f32 %v2185, 0.0
    %v2262 = vmax.f32 %v2187, 0.0
    %v2263 = vmax.f32 %v1396, 0.0
    %v2264 = vmax.f32 %v1398, 0.0
    %v2265 = vmax.f32 %v1449, 0.0
    %v2266 = vmax.f32 %v1451, 0.0
    %v2267 = vmax.f32 %v1502, 0.0
    %v2268 = vmax.f32 %v1504, 0.0
    %v2269 = vmax.f32 %v1555, 0.0
    %v2270 = vmax.f32 %v1557, 0.0
    %v2271 = vmax.f32 %v1608, 0.0
    %v2272 = vmax.f32 %v1610, 0.0
    %v2273 = vmax.f32 %v1661, 0.0
    %v2274 = vmax.f32 %v1663, 0.0
    %v2275 = vmax.f32 %v1714, 0.0
    %v2276 = vmax.f32 %v1716, 0.0
    %v2277 = vmax.f32 %v1767, 0.0
    %v2278 = vmax.f32 %v1769, 0.0
    %v2279 = vmax.f32 %v1820, 0.0
    %v2280 = vmax.f32 %v1822, 0.0
    %v2281 = vmax.f32 %v1873, 0.0
    %v2282 = vmax.f32 %v1875, 0.0
    %v2283 = vmax.f32 %v1926, 0.0
    %v2284 = vmax.f32 %v1928, 0.0
    %v2285 = vmax.f32 %v1979, 0.0
    %v2286 = vmax.f32 %v1981, 0.0
    %v2287 = vmax.f32 %v2032, 0.0
    %v2288 = vmax.f32 %v2034, 0.0
    %v2289 = vmax.f32 %v2085, 0.0
    %v2290 = vmax.f32 %v2087, 0.0
    %v2291 = vmax.f32 %v2138, 0.0
    %v2292 = vmax.f32 %v2140, 0.0
    %v2293 = vmax.f32 %v2191, 0.0
    %v2294 = vmax.f32 %v2193, 0.0
    %v2295 = vmax.f32 %v1400, 0.0
    %v2296 = vmax.f32 %v1402, 0.0
    %v2297 = vmax.f32 %v1453, 0.0
    %v2298 = vmax.f32 %v1455, 0.0
    %v2299 = vmax.f32 %v1506, 0.0
    %v2300 = vmax.f32 %v1508, 0.0
    %v2301 = vmax.f32 %v1559, 0.0
    %v2302 = vmax.f32 %v1561, 0.0
    %v2303 = vmax.f32 %v1612, 0.0
    %v2304 = vmax.f32 %v1614, 0.0
    %v2305 = vmax.f32 %v1665, 0.0
    %v2306 = vmax.f32 %v1667, 0.0
    %v2307 = vmax.f32 %v1718, 0.0
    %v2308 = vmax.f32 %v1720, 0.0
    %v2309 = vmax.f32 %v1771, 0.0
    %v2310 = vmax.f32 %v1773, 0.0
    %v2311 = vmax.f32 %v1824, 0.0
    %v2312 = vmax.f32 %v1826, 0.0
    %v2313 = vmax.f32 %v1877, 0.0
    %v2314 = vmax.f32 %v1879, 0.0
    %v2315 = vmax.f32 %v1930, 0.0
    %v2316 = vmax.f32 %v1932, 0.0
    %v2317 = vmax.f32 %v1983, 0.0
    %v2318 = vmax.f32 %v1985, 0.0
    %v2319 = vmax.f32 %v2036, 0.0
    %v2320 = vmax.f32 %v2038, 0.0
    %v2321 = vmax.f32 %v2089, 0.0
    %v2322 = vmax.f32 %v2091, 0.0
    %v2323 = vmax.f32 %v2142, 0.0
    %v2324 = vmax.f32 %v2144, 0.0
    %v2325 = vmax.f32 %v2195, 0.0
    %v2326 = vmax.f32 %v2197, 0.0
    %v2327 = vpack.c.bf16 %v2231, %v2199
    %v2328 = vpack.c.bf16 %v2232, %v2200
    %v2329 = vpack.c.bf16 %v2233, %v2201
    %v2330 = vpack.c.bf16 %v2234, %v2202
    %v2331 = vpack.c.bf16 %v2235, %v2203
    %v2332 = vpack.c.bf16 %v2236, %v2204
    %v2333 = vpack.c.bf16 %v2237, %v2205
    %v2334 = vpack.c.bf16 %v2238, %v2206
    %v2335 = vpack.c.bf16 %v2239, %v2207
    %v2336 = vpack.c.bf16 %v2240, %v2208
    %v2337 = vpack.c.bf16 %v2241, %v2209
    %v2338 = vpack.c.bf16 %v2242, %v2210
    %v2339 = vpack.c.bf16 %v2243, %v2211
    %v2340 = vpack.c.bf16 %v2244, %v2212
    %v2341 = vpack.c.bf16 %v2245, %v2213
    %v2342 = vpack.c.bf16 %v2246, %v2214
    %v2343 = vpack.c.bf16 %v2247, %v2215
    %v2344 = vpack.c.bf16 %v2248, %v2216
    %v2345 = vpack.c.bf16 %v2249, %v2217
    %v2346 = vpack.c.bf16 %v2250, %v2218
    %v2347 = vpack.c.bf16 %v2251, %v2219
    %v2348 = vpack.c.bf16 %v2252, %v2220
    %v2349 = vpack.c.bf16 %v2253, %v2221
    %v2350 = vpack.c.bf16 %v2254, %v2222
    %v2351 = vpack.c.bf16 %v2255, %v2223
    %v2352 = vpack.c.bf16 %v2256, %v2224
    %v2353 = vpack.c.bf16 %v2257, %v2225
    %v2354 = vpack.c.bf16 %v2258, %v2226
    %v2355 = vpack.c.bf16 %v2259, %v2227
    %v2356 = vpack.c.bf16 %v2260, %v2228
    %v2357 = vpack.c.bf16 %v2261, %v2229
    %v2358 = vpack.c.bf16 %v2262, %v2230
    %v2359 = vpack.c.bf16 %v2295, %v2263
    %v2360 = vpack.c.bf16 %v2296, %v2264
    %v2361 = vpack.c.bf16 %v2297, %v2265
    %v2362 = vpack.c.bf16 %v2298, %v2266
    %v2363 = vpack.c.bf16 %v2299, %v2267
    %v2364 = vpack.c.bf16 %v2300, %v2268
    %v2365 = vpack.c.bf16 %v2301, %v2269
    %v2366 = vpack.c.bf16 %v2302, %v2270
    %v2367 = vpack.c.bf16 %v2303, %v2271
    %v2368 = vpack.c.bf16 %v2304, %v2272
    %v2369 = vpack.c.bf16 %v2305, %v2273
    %v2370 = vpack.c.bf16 %v2306, %v2274
    %v2371 = vpack.c.bf16 %v2307, %v2275
    %v2372 = vpack.c.bf16 %v2308, %v2276
    %v2373 = vpack.c.bf16 %v2309, %v2277
    %v2374 = vpack.c.bf16 %v2310, %v2278
    %v2375 = vpack.c.bf16 %v2311, %v2279
    %v2376 = vpack.c.bf16 %v2312, %v2280
    %v2377 = vpack.c.bf16 %v2313, %v2281
    %v2378 = vpack.c.bf16 %v2314, %v2282
    %v2379 = vpack.c.bf16 %v2315, %v2283
    %v2380 = vpack.c.bf16 %v2316, %v2284
    %v2381 = vpack.c.bf16 %v2317, %v2285
    %v2382 = vpack.c.bf16 %v2318, %v2286
    %v2383 = vpack.c.bf16 %v2319, %v2287
    %v2384 = vpack.c.bf16 %v2320, %v2288
    %v2385 = vpack.c.bf16 %v2321, %v2289
    %v2386 = vpack.c.bf16 %v2322, %v2290
    %v2387 = vpack.c.bf16 %v2323, %v2291
    %v2388 = vpack.c.bf16 %v2324, %v2292
    %v2389 = vpack.c.bf16 %v2325, %v2293
    %v2390 = vpack.c.bf16 %v2326, %v2294
    %2391 = vst [vmem:[#allocation2] sm:$0xff] %v2327
    %2392 = vst [vmem:[#allocation2 + $0x8] sm:$0xff] %v2328
    %2393 = vst [vmem:[#allocation2 + $0x10] sm:$0xff] %v2329
    %2394 = vst [vmem:[#allocation2 + $0x18] sm:$0xff] %v2330
    %2395 = vst [vmem:[#allocation2 + $0x20] sm:$0xff] %v2331
    %2396 = vst [vmem:[#allocation2 + $0x28] sm:$0xff] %v2332
    %2397 = vst [vmem:[#allocation2 + $0x30] sm:$0xff] %v2333
    %2398 = vst [vmem:[#allocation2 + $0x38] sm:$0xff] %v2334
    %2399 = vst [vmem:[#allocation2 + $0x40] sm:$0xff] %v2335
    %2400 = vst [vmem:[#allocation2 + $0x48] sm:$0xff] %v2336
    %2401 = vst [vmem:[#allocation2 + $0x50] sm:$0xff] %v2337
    %2402 = vst [vmem:[#allocation2 + $0x58] sm:$0xff] %v2338
    %2403 = vst [vmem:[#allocation2 + $0x60] sm:$0xff] %v2339
    %2404 = vst [vmem:[#allocation2 + $0x68] sm:$0xff] %v2340
    %2405 = vst [vmem:[#allocation2 + $0x70] sm:$0xff] %v2341
    %2406 = vst [vmem:[#allocation2 + $0x78] sm:$0xff] %v2342
    %2407 = vst [vmem:[#allocation2 + $0x80] sm:$0xff] %v2343
    %2408 = vst [vmem:[#allocation2 + $0x88] sm:$0xff] %v2344
    %2409 = vst [vmem:[#allocation2 + $0x90] sm:$0xff] %v2345
    %2410 = vst [vmem:[#allocation2 + $0x98] sm:$0xff] %v2346
    %2411 = vst [vmem:[#allocation2 + $0xa0] sm:$0xff] %v2347
    %2412 = vst [vmem:[#allocation2 + $0xa8] sm:$0xff] %v2348
    %2413 = vst [vmem:[#allocation2 + $0xb0] sm:$0xff] %v2349
    %2414 = vst [vmem:[#allocation2 + $0xb8] sm:$0xff] %v2350
    %2415 = vst [vmem:[#allocation2 + $0xc0] sm:$0xff] %v2351
    %2416 = vst [vmem:[#allocation2 + $0xc8] sm:$0xff] %v2352
    %2417 = vst [vmem:[#allocation2 + $0xd0] sm:$0xff] %v2353
    %2418 = vst [vmem:[#allocation2 + $0xd8] sm:$0xff] %v2354
    %2419 = vst [vmem:[#allocation2 + $0xe0] sm:$0xff] %v2355
    %2420 = vst [vmem:[#allocation2 + $0xe8] sm:$0xff] %v2356
    %2421 = vst [vmem:[#allocation2 + $0xf0] sm:$0xff] %v2357
    %2422 = vst [vmem:[#allocation2 + $0xf8] sm:$0xff] %v2358
    %2423 = vst [vmem:[#allocation2 + $0x100] sm:$0xff] %v2359
    %2424 = vst [vmem:[#allocation2 + $0x108] sm:$0xff] %v2360
    %2425 = vst [vmem:[#allocation2 + $0x110] sm:$0xff] %v2361
    %2426 = vst [vmem:[#allocation2 + $0x118] sm:$0xff] %v2362
    %2427 = vst [vmem:[#allocation2 + $0x120] sm:$0xff] %v2363
    %2428 = vst [vmem:[#allocation2 + $0x128] sm:$0xff] %v2364
    %2429 = vst [vmem:[#allocation2 + $0x130] sm:$0xff] %v2365
    %2430 = vst [vmem:[#allocation2 + $0x138] sm:$0xff] %v2366
    %2431 = vst [vmem:[#allocation2 + $0x140] sm:$0xff] %v2367
    %2432 = vst [vmem:[#allocation2 + $0x148] sm:$0xff] %v2368
    %2433 = vst [vmem:[#allocation2 + $0x150] sm:$0xff] %v2369
    %2434 = vst [vmem:[#allocation2 + $0x158] sm:$0xff] %v2370
    %2435 = vst [vmem:[#allocation2 + $0x160] sm:$0xff] %v2371
    %2436 = vst [vmem:[#allocation2 + $0x168] sm:$0xff] %v2372
    %2437 = vst [vmem:[#allocation2 + $0x170] sm:$0xff] %v2373
    %2438 = vst [vmem:[#allocation2 + $0x178] sm:$0xff] %v2374
    %2439 = vst [vmem:[#allocation2 + $0x180] sm:$0xff] %v2375
    %2440 = vst [vmem:[#allocation2 + $0x188] sm:$0xff] %v2376
    %2441 = vst [vmem:[#allocation2 + $0x190] sm:$0xff] %v2377
    %2442 = vst [vmem:[#allocation2 + $0x198] sm:$0xff] %v2378
    %2443 = vst [vmem:[#allocation2 + $0x1a0] sm:$0xff] %v2379
    %2444 = vst [vmem:[#allocation2 + $0x1a8] sm:$0xff] %v2380
    %2445 = vst [vmem:[#allocation2 + $0x1b0] sm:$0xff] %v2381
    %2446 = vst [vmem:[#allocation2 + $0x1b8] sm:$0xff] %v2382
    %2447 = vst [vmem:[#allocation2 + $0x1c0] sm:$0xff] %v2383
    %2448 = vst [vmem:[#allocation2 + $0x1c8] sm:$0xff] %v2384
    %2449 = vst [vmem:[#allocation2 + $0x1d0] sm:$0xff] %v2385
    %2450 = vst [vmem:[#allocation2 + $0x1d8] sm:$0xff] %v2386
    %2451 = vst [vmem:[#allocation2 + $0x1e0] sm:$0xff] %v2387
    %2452 = vst [vmem:[#allocation2 + $0x1e8] sm:$0xff] %v2388
    %2453 = vst [vmem:[#allocation2 + $0x1f0] sm:$0xff] %v2389
    %2454 = vst [vmem:[#allocation2 + $0x1f8] sm:$0xff] %v2390
    %v2455 = vld [vmem:[%s5] sm:$0xf]
    %v2456 = vld [vmem:[%s5 + $0x4] sm:$0xf]
    %v2457 = vld [vmem:[%s5 + $0x8] sm:$0xf]
    %v2458 = vld [vmem:[%s5 + $0xc] sm:$0xf]
    %v2459 = vld [vmem:[%s5 + $0x10] sm:$0xf]
    %v2460 = vld [vmem:[%s5 + $0x14] sm:$0xf]
    %v2461 = vld [vmem:[%s5 + $0x18] sm:$0xf]
    %v2462 = vld [vmem:[%s5 + $0x1c] sm:$0xf]
    %v2463 = vld [vmem:[%s6] sm:$0xff]
    %v2464 = vld [vmem:[%s6 + $0x8] sm:$0xff]
    %v2465 = vld [vmem:[%s6 + $0x10] sm:$0xff]
    %v2466 = vld [vmem:[%s6 + $0x18] sm:$0xff]
    %v2467 = vld [vmem:[%s6 + $0x20] sm:$0xff]
    %v2468 = vld [vmem:[%s6 + $0x28] sm:$0xff]
    %v2469 = vld [vmem:[%s6 + $0x30] sm:$0xff]
    %v2470 = vld [vmem:[%s6 + $0x38] sm:$0xff]
    loop: start=0, step=1, limit=32
    $region30: #{tpu_custom_call.1} parent=1 // loop_pre_header
      _
    $region31: #{tpu_custom_call.1} parent=1 // loop_header
      %s2472 = sphi 0, %s2476
      %p2473 = scmp.ge.s32.totalorder %s2472, 32
      %v2477 = vphi -inf, %v2637
      %v2478 = vphi -inf, %v2638
      %v2479 = vphi -inf, %v2639
      %v2480 = vphi -inf, %v2640
      %v2481 = vphi -inf, %v2641
      %v2482 = vphi -inf, %v2642
      %v2483 = vphi -inf, %v2643
      %v2484 = vphi -inf, %v2644
    $region32: #{tpu_custom_call.1} parent=1 // loop_header_branch
      %2475 = sbr.rel (%p2473) target = $region36
    $region33: #{tpu_custom_call.1} parent=1 // loop_body
      %s2485 = smul.u32 %s2472, 128
      %s2486 = sshra.s32 %s2485, 7
      %s2487 = sand.u32 %s2485, 127
      %s2488 = smul.addr %s2486, 8
      %s2489 = scalar_lea.vmem [#allocation2], %s2488
      %v2490 = vld [vmem:[%s2489] sm:$0xff]
      %v2491 = vld [vmem:[%s2489 + $0x100] sm:$0xff]
      %2493 = vset.pattern.permute.xlu0 0
      %2494 = vperm.xlu0 %2493, %v2463
      %v2495 = vpop.permute.xlu0 %2494
      %2498 = vset.pattern.permute.xlu0 0
      %2499 = vperm.xlu0 %2498, %v2464
      %v2500 = vpop.permute.xlu0 %2499
      %2503 = vset.pattern.permute.xlu0 0
      %2504 = vperm.xlu0 %2503, %v2465
      %v2505 = vpop.permute.xlu0 %2504
      %2508 = vset.pattern.permute.xlu0 0
      %2509 = vperm.xlu0 %2508, %v2466
      %v2510 = vpop.permute.xlu0 %2509
      %2513 = vset.pattern.permute.xlu0 0
      %2514 = vperm.xlu0 %2513, %v2467
      %v2515 = vpop.permute.xlu0 %2514
      %2518 = vset.pattern.permute.xlu0 0
      %2519 = vperm.xlu0 %2518, %v2468
      %v2520 = vpop.permute.xlu0 %2519
      %2523 = vset.pattern.permute.xlu0 0
      %2524 = vperm.xlu0 %2523, %v2469
      %v2525 = vpop.permute.xlu0 %2524
      %2528 = vset.pattern.permute.xlu0 0
      %2529 = vperm.xlu0 %2528, %v2470
      %v2530 = vpop.permute.xlu0 %2529
      %v2540 = vunpack.c.l.b16 %v2455
      %v2541 = vunpack.c.l.b16 %v2456
      %v2542 = vunpack.c.l.b16 %v2457
      %v2543 = vunpack.c.l.b16 %v2458
      %v2544 = vunpack.c.l.b16 %v2459
      %v2545 = vunpack.c.l.b16 %v2460
      %v2546 = vunpack.c.l.b16 %v2461
      %v2547 = vunpack.c.l.b16 %v2462
      %v2548 = vpack.c.b16 %v2541, %v2540
      %v2549 = vpack.c.b16 %v2543, %v2542
      %v2550 = vpack.c.b16 %v2545, %v2544
      %v2551 = vpack.c.b16 %v2547, %v2546
      %v2553 = vsel %vm1344, %v2548, 0
      %v2556 = vsel %vm1344, %v2549, 0
      %v2559 = vsel %vm1344, %v2550, 0
      %v2562 = vsel %vm1344, %v2551, 0
      %2564 = vmatprep.subr.bf16.mxu0 0
      %2565 = vmatpush1.bf16.msra.mxu0 %v2490
      %2566 = vmatprep.subr.bf16.mxu0 0
      %2567 = vmatpush1.bf16.msra.mxu0 %v2491
      %2568 = vmatprep.subr.bf16.mxu0 0
      %2569 = vmatpush1.bf16.msra.mxu0 0
      %2570 = vmatprep.subr.bf16.mxu0 0
      %2571 = vmatpush1.bf16.msra.mxu0 0
      %2572 = vmatprep.subr.bf16.mxu0 0
      %2573 = vmatpush1.bf16.msra.mxu0 0
      %2574 = vmatprep.subr.bf16.mxu0 0
      %2575 = vmatpush1.bf16.msra.mxu0 0
      %2576 = vmatprep.subr.bf16.mxu0 0
      %2577 = vmatpush1.bf16.msra.mxu0 0
      %2578 = vmatprep.subr.bf16.mxu0 0
      %2579 = vmatpush1.bf16.msra.mxu0 0
      %2580 = vmatprep.subr.bf16.mxu0 0
      %2581 = vmatpush1.bf16.msra.mxu0 0
      %2582 = vmatprep.subr.bf16.mxu0 0
      %2583 = vmatpush1.bf16.msra.mxu0 0
      %2584 = vmatprep.subr.bf16.mxu0 0
      %2585 = vmatpush1.bf16.msra.mxu0 0
      %2586 = vmatprep.subr.bf16.mxu0 0
      %2587 = vmatpush1.bf16.msra.mxu0 0
      %2588 = vmatprep.subr.bf16.mxu0 0
      %2589 = vmatpush1.bf16.msra.mxu0 0
      %2590 = vmatprep.subr.bf16.mxu0 0
      %2591 = vmatpush1.bf16.msra.mxu0 0
      %2592 = vmatprep.subr.bf16.mxu0 0
      %2593 = vmatpush1.bf16.msra.mxu0 0
      %2594 = vmatprep.subr.bf16.mxu0 0
      %2595 = vmatpush1.bf16.msra.mxu0 0
      %2596 = vmatprep.mubr.bf16.mxu0 0
      %2597 = vmatmul.mubr.bf16.gmra.mrb[0].mxu0 %v2553
      %v2598 = vpop.f32.mrb[0].mxu0
      %v2599 = vadd.f32 %v2495, %v2598
      %v2600 = vpop.f32.mrb[0].mxu0
      %v2601 = vpop.f32.mrb[0].mxu0
      %v2602 = vadd.f32 %v2500, %v2601
      %v2603 = vpop.f32.mrb[0].mxu0
      %2604 = vmatprep.mubr.bf16.mxu0 0
      %2605 = vmatmul.mubr.bf16.gmra.mrb[0].mxu0 %v2556
      %v2606 = vpop.f32.mrb[0].mxu0
      %v2607 = vadd.f32 %v2505, %v2606
      %v2608 = vpop.f32.mrb[0].mxu0
      %v2609 = vpop.f32.mrb[0].mxu0
      %v2610 = vadd.f32 %v2510, %v2609
      %v2611 = vpop.f32.mrb[0].mxu0
      %2612 = vmatprep.mubr.bf16.mxu0 0
      %2613 = vmatmul.mubr.bf16.gmra.mrb[0].mxu0 %v2559
      %v2614 = vpop.f32.mrb[0].mxu0
      %v2615 = vadd.f32 %v2515, %v2614
      %v2616 = vpop.f32.mrb[0].mxu0
      %v2617 = vpop.f32.mrb[0].mxu0
      %v2618 = vadd.f32 %v2520, %v2617
      %v2619 = vpop.f32.mrb[0].mxu0
      %2620 = vmatprep.mubr.bf16.mxu0 0
      %2621 = vmatmul.mubr.bf16.gmra.mrb[0].mxu0 %v2562
      %v2622 = vpop.f32.mrb[0].mxu0
      %v2623 = vadd.f32 %v2525, %v2622
      %v2624 = vpop.f32.mrb[0].mxu0
      %v2625 = vpop.f32.mrb[0].mxu0
      %v2626 = vadd.f32 %v2530, %v2625
      %v2627 = vpop.f32.mrb[0].mxu0
      %2628 = vdwg.mxu0
      %v2629 = vmax.f32 %v2599, 0.0
      %v2630 = vmax.f32 %v2602, 0.0
      %v2631 = vmax.f32 %v2607, 0.0
      %v2632 = vmax.f32 %v2610, 0.0
      %v2633 = vmax.f32 %v2615, 0.0
      %v2634 = vmax.f32 %v2618, 0.0
      %v2635 = vmax.f32 %v2623, 0.0
      %v2636 = vmax.f32 %v2626, 0.0
      %v2637 = vmax.f32 %v2477, %v2629
      %v2638 = vmax.f32 %v2478, %v2630
      %v2639 = vmax.f32 %v2479, %v2631
      %v2640 = vmax.f32 %v2480, %v2632
      %v2641 = vmax.f32 %v2481, %v2633
      %v2642 = vmax.f32 %v2482, %v2634
      %v2643 = vmax.f32 %v2483, %v2635
      %v2644 = vmax.f32 %v2484, %v2636
    $region34: #{tpu_custom_call.1} parent=1 // loop_footer
      %s2476 = sadd.s32 1, %s2472
    $region35: #{tpu_custom_call.1} parent=1 // loop_footer_branch
      %2471 = sbr.rel target = $region31
    $region36: #{tpu_custom_call.1} parent=1 // loop_exit
      _
    %2645 = vst [vmem:[#allocation3] sm:$0xff] %v2477
    %2646 = vst [vmem:[#allocation3 + $0x8] sm:$0xff] %v2478
    %2647 = vst [vmem:[#allocation3 + $0x10] sm:$0xff] %v2479
    %2648 = vst [vmem:[#allocation3 + $0x18] sm:$0xff] %v2480
    %2649 = vst [vmem:[#allocation3 + $0x20] sm:$0xff] %v2481
    %2650 = vst [vmem:[#allocation3 + $0x28] sm:$0xff] %v2482
    %2651 = vst [vmem:[#allocation3 + $0x30] sm:$0xff] %v2483
    %2652 = vst [vmem:[#allocation3 + $0x38] sm:$0xff] %v2484
    // Predicated region
    $region37: #{tpu_custom_call.1} parent=1 // pred_check
      _
    $region38: #{tpu_custom_call.1} parent=1 // pred_check_branch
      %2654 = sbr.rel (0) target = $region40
    $region39: #{tpu_custom_call.1} parent=1 // pred_region
      %s2656 = ssub.s32 1024, 1024
      %2657 = vsyncadd [#allocation4], %s2656
      %s2658 = sshll.u32 [#allocation3], 4
      %s2659 = int_to_ptr.vmem [resolvable:$true] %s2658
      %2664 = dma.vmem_to_hbm [thread:$0]  %s2659, 1024, %s7, [#allocation4], 128, 128, 8
    $region40: #{tpu_custom_call.1} parent=1 // pred_fallthru
      _
    // Predicated region
    $region41: #{tpu_custom_call.1} parent=1 // pred_check
      _
    $region42: #{tpu_custom_call.1} parent=1 // pred_check_branch
      %2666 = sbr.rel (0) target = $region44
    $region43: #{tpu_custom_call.1} parent=1 // pred_region
      %2667 = dma.done [#allocation4], 1024
    $region44: #{tpu_custom_call.1} parent=1 // pred_fallthru
      _
    %2668 = vsyncpa [#allocation4], 1

</llo_original>
